<compile_context>
chip_gen: v6e
topology: v6e:2x2x1
jax: 0.10.0
libtpu: 0.0.40
codegen_flags: <defaults>
</compile_context>

<pallas_src>
import functools

import jax
import jax.numpy as jnp
from jax.experimental import pallas as pl
from jax.experimental.pallas import tpu as pltpu


def gru_fused_kernel(B, S, tok_ref, emb_ref, wi_ref, wh_ref, bi_ref, bh_ref,
                     wfc_ref, bfc_ref, logits_ref):
    """Whole forward pass in one kernel invocation (single grid point).

    tok_ref   : (S*B, 1)      int32  time-major flattened (padded) tokens
    emb_ref   : (Vp, E)       f32    embedding table (rows zero-padded to Vp)
    wi_ref    : (3, E, H)     f32    per-gate input weights   [r, z, n]
    wh_ref    : (3, H, H)     f32    per-gate hidden weights  [r, z, n]
    bi_ref    : (3, 1, H)     f32    per-gate input biases
    bh_ref    : (3, 1, H)     f32    per-gate hidden biases
    wfc_ref   : (H, Vout_pad) f32    FC weight, cols zero-padded (lane-dense)
    bfc_ref   : (1, Vout_pad) f32    FC bias, cols zero-padded
    logits_ref: (B, Vout_pad) f32    output
    """
    SB = tok_ref.shape[0]
    Vp = emb_ref.shape[0]

    # --- fused embedding lookup: exact one-hot matmul on the MXU ---
    tok = tok_ref[...]                                             # (SB, 1)
    onehot = (tok == jax.lax.broadcasted_iota(jnp.int32, (SB, Vp), 1)
              ).astype(jnp.float32)                                # (SB, Vp)
    x_all = jnp.dot(onehot, emb_ref[...],
                    preferred_element_type=jnp.float32)            # (SB, E)

    # --- hoisted input projections for all timesteps (off the serial path) ---
    gi_r = jnp.dot(x_all, wi_ref[0], preferred_element_type=jnp.float32) + bi_ref[0]
    gi_z = jnp.dot(x_all, wi_ref[1], preferred_element_type=jnp.float32) + bi_ref[1]
    gi_n = jnp.dot(x_all, wi_ref[2], preferred_element_type=jnp.float32) + bi_ref[2]

    w_hr, w_hz, w_hn = wh_ref[0], wh_ref[1], wh_ref[2]
    b_hr, b_hz, b_hn = bh_ref[0], bh_ref[1], bh_ref[2]

    H = w_hr.shape[0]
    h = jnp.zeros((B, H), jnp.float32)                             # h0 = zeros

    # --- recurrence: fully unrolled (S static), only h @ W_h* is dependent ---
    for t in range(S):
        lo = t * B                                                 # static slice
        hr = jnp.dot(h, w_hr, preferred_element_type=jnp.float32) + b_hr
        hz = jnp.dot(h, w_hz, preferred_element_type=jnp.float32) + b_hz
        hn = jnp.dot(h, w_hn, preferred_element_type=jnp.float32) + b_hn
        r = jax.nn.sigmoid(gi_r[lo:lo + B, :] + hr)
        z = jax.nn.sigmoid(gi_z[lo:lo + B, :] + hz)
        n = jnp.tanh(gi_n[lo:lo + B, :] + r * hn)
        h = (1.0 - z) * n + z * h

    # --- final Linear, lane-dense (padded) output store ---
    logits_ref[...] = (jnp.dot(h, wfc_ref[...],
                               preferred_element_type=jnp.float32)
                       + bfc_ref[...])


@jax.jit
def ball_predictor_forward(tokens, params):
    """tokens: (B, S) int32.  Returns logits (B, vocab_size) float32."""
    emb = params["embedding"]                      # (V, E)
    B, S = tokens.shape
    V, E = emb.shape
    H = params["w_hh_g"].shape[2]

    # pad batch to a full sublane group, vocab dims to clean layouts
    B_pad = max(8, ((B + 7) // 8) * 8)
    V_emb_pad = max(8, ((V + 7) // 8) * 8)
    V_out_pad = 128                                # lane-dense output columns

    tok = tokens.astype(jnp.int32)
    if B_pad != B:
        tok = jnp.pad(tok, ((0, B_pad - B), (0, 0)))              # pad rows: token 0
    tok_tm = jnp.transpose(tok, (1, 0)).reshape(S * B_pad, 1)     # time-major flatten

    emb_pad = jnp.zeros((V_emb_pad, E), jnp.float32).at[:V, :].set(emb)
    w_fc_pad = jnp.zeros((H, V_out_pad), jnp.float32).at[:, :V].set(params["w_fc_t"])
    b_fc_pad = jnp.zeros((1, V_out_pad), jnp.float32).at[:, :V].set(params["b_fc"])

    kernel = functools.partial(gru_fused_kernel, B_pad, S)

    logits_pad = pl.pallas_call(
        kernel,
        out_shape=jax.ShapeDtypeStruct((B_pad, V_out_pad), jnp.float32),
        grid=(1,),                                                 # single grid point
        in_specs=[
            pl.BlockSpec((S * B_pad, 1), lambda i: (0, 0)),        # tokens
            pl.BlockSpec((V_emb_pad, E), lambda i: (0, 0)),        # embedding table
            pl.BlockSpec((3, E, H), lambda i: (0, 0, 0)),          # W_i{r,z,n}
            pl.BlockSpec((3, H, H), lambda i: (0, 0, 0)),          # W_h{r,z,n}
            pl.BlockSpec((3, 1, H), lambda i: (0, 0, 0)),          # b_i{r,z,n}
            pl.BlockSpec((3, 1, H), lambda i: (0, 0, 0)),          # b_h{r,z,n}
            pl.BlockSpec((H, V_out_pad), lambda i: (0, 0)),        # W_fc (padded)
            pl.BlockSpec((1, V_out_pad), lambda i: (0, 0)),        # b_fc (padded)
        ],
        out_specs=pl.BlockSpec((B_pad, V_out_pad), lambda i: (0, 0)),
        compiler_params=pltpu.CompilerParams(
            dimension_semantics=("arbitrary",)),
    )(tok_tm, emb_pad, params["w_ih_g"], params["w_hh_g"],
      params["b_ih_g"], params["b_hh_g"], w_fc_pad, b_fc_pad)

    return logits_pad[:B, :V]


def ball_predictor_reference(tokens, params):
    """Pure-JAX reference with identical GRU semantics (PyTorch gate order)."""
    x = jnp.take(params["embedding"], tokens, axis=0)              # (B, S, E)
    B, S, _ = x.shape
    H = params["w_hh_g"].shape[2]
    wi, wh = params["w_ih_g"], params["w_hh_g"]
    bi, bh = params["b_ih_g"], params["b_hh_g"]
    h = jnp.zeros((B, H), jnp.float32)
    for t in range(S):
        xt = x[:, t, :]
        r = jax.nn.sigmoid(xt @ wi[0] + bi[0] + h @ wh[0] + bh[0])
        z = jax.nn.sigmoid(xt @ wi[1] + bi[1] + h @ wh[1] + bh[1])
        n = jnp.tanh(xt @ wi[2] + bi[2] + r * (h @ wh[2] + bh[2]))
        h = (1.0 - z) * n + z * h
    return h @ params["w_fc_t"] + params["b_fc"]


def init_params(key, vocab_size=7, embed_dim=16, hidden_size=32):
    """Deterministic synthetic parameters (per-gate layout, pre-transposed)."""
    ks = jax.random.split(key, 7)
    k = 1.0 / jnp.sqrt(hidden_size)
    u = lambda kk, shape: jax.random.uniform(kk, shape, jnp.float32, -k, k)
    return {
        # nn.Embedding(vocab, embed): N(0, 1)
        "embedding": jax.random.normal(ks[0], (vocab_size, embed_dim), jnp.float32),
        # nn.GRU weight_ih_l0 (3H, E), gate order [r, z, n] -> per-gate (3, E, H)
        "w_ih_g": u(ks[1], (3, embed_dim, hidden_size)),
        # nn.GRU weight_hh_l0 (3H, H) -> per-gate (3, H, H)
        "w_hh_g": u(ks[2], (3, hidden_size, hidden_size)),
        "b_ih_g": u(ks[3], (3, 1, hidden_size)),
        "b_hh_g": u(ks[4], (3, 1, hidden_size)),
        # nn.Linear(H, V): weight (V, H) -> stored transposed (H, V)
        "w_fc_t": u(ks[5], (hidden_size, vocab_size)),
        "b_fc": u(ks[6], (1, vocab_size)),
    }


if __name__ == "__main__":
    key = jax.random.PRNGKey(0)
    kp, kx = jax.random.split(key)

    vocab_size, embed_dim, hidden_size = 7, 16, 32
    B, S = 2, 8

    params = init_params(kp, vocab_size, embed_dim, hidden_size)
    tokens = jax.random.randint(kx, (B, S), 0, vocab_size, dtype=jnp.int32)

    logits = ball_predictor_forward(tokens, params)
    jax.block_until_ready(logits)
    assert logits.shape == (B, vocab_size) and logits.dtype == jnp.float32

    ref = ball_predictor_reference(tokens, params)
    assert jnp.allclose(logits, ref, atol=1e-4, rtol=1e-4)

    print("KERNEL_OK")
</pallas_src>

<mosaic_0001>
module attributes {stable_mosaic.version = 11 : i64} {
  func.func @gru_fused_kernel(%arg0: i32, %arg1: memref<64x1xi32, #tpu.memory_space<vmem>>, %arg2: memref<8x16xf32, #tpu.memory_space<vmem>>, %arg3: memref<3x16x32xf32, #tpu.memory_space<vmem>>, %arg4: memref<3x32x32xf32, #tpu.memory_space<vmem>>, %arg5: memref<3x1x32xf32, #tpu.memory_space<vmem>>, %arg6: memref<3x1x32xf32, #tpu.memory_space<vmem>>, %arg7: memref<32x128xf32, #tpu.memory_space<vmem>>, %arg8: memref<1x128xf32, #tpu.memory_space<vmem>>, %arg9: memref<8x128xf32, #tpu.memory_space<vmem>>) attributes {dimension_semantics = [#tpu.dimension_semantics<arbitrary>], iteration_bounds = array<i64: 1>, scalar_prefetch = 0 : i64, scratch_operands = 0 : i64, tpu.core_type = #tpu.core_type<tc>, window_params = [{pipeline_mode = #tpu.pipeline_mode<synchronous>, transform_indices = @transform_0, window_bounds = array<i64: 64, 1>}, {pipeline_mode = #tpu.pipeline_mode<synchronous>, transform_indices = @transform_1, window_bounds = array<i64: 8, 16>}, {pipeline_mode = #tpu.pipeline_mode<synchronous>, transform_indices = @transform_2, window_bounds = array<i64: 3, 16, 32>}, {pipeline_mode = #tpu.pipeline_mode<synchronous>, transform_indices = @transform_3, window_bounds = array<i64: 3, 32, 32>}, {pipeline_mode = #tpu.pipeline_mode<synchronous>, transform_indices = @transform_4, window_bounds = array<i64: 3, 1, 32>}, {pipeline_mode = #tpu.pipeline_mode<synchronous>, transform_indices = @transform_5, window_bounds = array<i64: 3, 1, 32>}, {pipeline_mode = #tpu.pipeline_mode<synchronous>, transform_indices = @transform_6, window_bounds = array<i64: 32, 128>}, {pipeline_mode = #tpu.pipeline_mode<synchronous>, transform_indices = @transform_7, window_bounds = array<i64: 1, 128>}, {pipeline_mode = #tpu.pipeline_mode<synchronous>, transform_indices = @transform_8, window_bounds = array<i64: 8, 128>}]} {
    %c0 = arith.constant 0 : index
    %c0_0 = arith.constant 0 : index
    %0 = vector.load %arg1[%c0, %c0_0] : memref<64x1xi32, #tpu.memory_space<vmem>>, vector<64x1xi32>
    %1 = tpu.iota {dimensions = array<i32: 1>} : vector<64x8xi32>
    %2 = vector.broadcast %0 : vector<64x1xi32> to vector<64x8xi32>
    %3 = arith.cmpi eq, %2, %1 : vector<64x8xi32>
    %4 = arith.extui %3 : vector<64x8xi1> to vector<64x8xi32>
    %5 = arith.sitofp %4 : vector<64x8xi32> to vector<64x8xf32>
    %c0_1 = arith.constant 0 : index
    %c0_2 = arith.constant 0 : index
    %6 = vector.load %arg2[%c0_1, %c0_2] : memref<8x16xf32, #tpu.memory_space<vmem>>, vector<8x16xf32>
    %cst = arith.constant dense<0.000000e+00> : vector<64x16xf32>
    %7 = tpu.matmul %5, %6, %cst {dimension_numbers = #tpu.dot_dimension_numbers<[1], [0], [0], [1], [0, 0, 1, 1], [], []>} : vector<64x8xf32>, vector<8x16xf32>, vector<64x16xf32> -> vector<64x16xf32>
    %c0_3 = arith.constant 0 : index
    %c0_4 = arith.constant 0 : index
    %c0_5 = arith.constant 0 : index
    %8 = vector.load %arg3[%c0_3, %c0_4, %c0_5] : memref<3x16x32xf32, #tpu.memory_space<vmem>>, vector<1x16x32xf32>
    %9 = vector.shape_cast %8 : vector<1x16x32xf32> to vector<16x32xf32>
    %cst_6 = arith.constant dense<0.000000e+00> : vector<64x32xf32>
    %10 = tpu.matmul %7, %9, %cst_6 {dimension_numbers = #tpu.dot_dimension_numbers<[1], [0], [0], [1], [0, 0, 1, 1], [], []>} : vector<64x16xf32>, vector<16x32xf32>, vector<64x32xf32> -> vector<64x32xf32>
    %c0_7 = arith.constant 0 : index
    %c0_8 = arith.constant 0 : index
    %c0_9 = arith.constant 0 : index
    %11 = vector.load %arg5[%c0_7, %c0_8, %c0_9] : memref<3x1x32xf32, #tpu.memory_space<vmem>>, vector<1x1x32xf32>
    %12 = vector.shape_cast %11 : vector<1x1x32xf32> to vector<1x32xf32>
    %13 = vector.broadcast %12 : vector<1x32xf32> to vector<64x32xf32>
    %14 = arith.addf %10, %13 : vector<64x32xf32>
    %c1 = arith.constant 1 : index
    %c0_10 = arith.constant 0 : index
    %c0_11 = arith.constant 0 : index
    %15 = vector.load %arg3[%c1, %c0_10, %c0_11] : memref<3x16x32xf32, #tpu.memory_space<vmem>>, vector<1x16x32xf32>
    %16 = vector.shape_cast %15 : vector<1x16x32xf32> to vector<16x32xf32>
    %cst_12 = arith.constant dense<0.000000e+00> : vector<64x32xf32>
    %17 = tpu.matmul %7, %16, %cst_12 {dimension_numbers = #tpu.dot_dimension_numbers<[1], [0], [0], [1], [0, 0, 1, 1], [], []>} : vector<64x16xf32>, vector<16x32xf32>, vector<64x32xf32> -> vector<64x32xf32>
    %c1_13 = arith.constant 1 : index
    %c0_14 = arith.constant 0 : index
    %c0_15 = arith.constant 0 : index
    %18 = vector.load %arg5[%c1_13, %c0_14, %c0_15] : memref<3x1x32xf32, #tpu.memory_space<vmem>>, vector<1x1x32xf32>
    %19 = vector.shape_cast %18 : vector<1x1x32xf32> to vector<1x32xf32>
    %20 = vector.broadcast %19 : vector<1x32xf32> to vector<64x32xf32>
    %21 = arith.addf %17, %20 : vector<64x32xf32>
    %c2 = arith.constant 2 : index
    %c0_16 = arith.constant 0 : index
    %c0_17 = arith.constant 0 : index
    %22 = vector.load %arg3[%c2, %c0_16, %c0_17] : memref<3x16x32xf32, #tpu.memory_space<vmem>>, vector<1x16x32xf32>
    %23 = vector.shape_cast %22 : vector<1x16x32xf32> to vector<16x32xf32>
    %cst_18 = arith.constant dense<0.000000e+00> : vector<64x32xf32>
    %24 = tpu.matmul %7, %23, %cst_18 {dimension_numbers = #tpu.dot_dimension_numbers<[1], [0], [0], [1], [0, 0, 1, 1], [], []>} : vector<64x16xf32>, vector<16x32xf32>, vector<64x32xf32> -> vector<64x32xf32>
    %c2_19 = arith.constant 2 : index
    %c0_20 = arith.constant 0 : index
    %c0_21 = arith.constant 0 : index
    %25 = vector.load %arg5[%c2_19, %c0_20, %c0_21] : memref<3x1x32xf32, #tpu.memory_space<vmem>>, vector<1x1x32xf32>
    %26 = vector.shape_cast %25 : vector<1x1x32xf32> to vector<1x32xf32>
    %27 = vector.broadcast %26 : vector<1x32xf32> to vector<64x32xf32>
    %28 = arith.addf %24, %27 : vector<64x32xf32>
    %c0_22 = arith.constant 0 : index
    %c0_23 = arith.constant 0 : index
    %c0_24 = arith.constant 0 : index
    %29 = vector.load %arg4[%c0_22, %c0_23, %c0_24] : memref<3x32x32xf32, #tpu.memory_space<vmem>>, vector<1x32x32xf32>
    %30 = vector.shape_cast %29 : vector<1x32x32xf32> to vector<32x32xf32>
    %c1_25 = arith.constant 1 : index
    %c0_26 = arith.constant 0 : index
    %c0_27 = arith.constant 0 : index
    %31 = vector.load %arg4[%c1_25, %c0_26, %c0_27] : memref<3x32x32xf32, #tpu.memory_space<vmem>>, vector<1x32x32xf32>
    %32 = vector.shape_cast %31 : vector<1x32x32xf32> to vector<32x32xf32>
    %c2_28 = arith.constant 2 : index
    %c0_29 = arith.constant 0 : index
    %c0_30 = arith.constant 0 : index
    %33 = vector.load %arg4[%c2_28, %c0_29, %c0_30] : memref<3x32x32xf32, #tpu.memory_space<vmem>>, vector<1x32x32xf32>
    %34 = vector.shape_cast %33 : vector<1x32x32xf32> to vector<32x32xf32>
    %c0_31 = arith.constant 0 : index
    %c0_32 = arith.constant 0 : index
    %c0_33 = arith.constant 0 : index
    %35 = vector.load %arg6[%c0_31, %c0_32, %c0_33] : memref<3x1x32xf32, #tpu.memory_space<vmem>>, vector<1x1x32xf32>
    %36 = vector.shape_cast %35 : vector<1x1x32xf32> to vector<1x32xf32>
    %c1_34 = arith.constant 1 : index
    %c0_35 = arith.constant 0 : index
    %c0_36 = arith.constant 0 : index
    %37 = vector.load %arg6[%c1_34, %c0_35, %c0_36] : memref<3x1x32xf32, #tpu.memory_space<vmem>>, vector<1x1x32xf32>
    %38 = vector.shape_cast %37 : vector<1x1x32xf32> to vector<1x32xf32>
    %c2_37 = arith.constant 2 : index
    %c0_38 = arith.constant 0 : index
    %c0_39 = arith.constant 0 : index
    %39 = vector.load %arg6[%c2_37, %c0_38, %c0_39] : memref<3x1x32xf32, #tpu.memory_space<vmem>>, vector<1x1x32xf32>
    %40 = vector.shape_cast %39 : vector<1x1x32xf32> to vector<1x32xf32>
    %cst_40 = arith.constant 0.000000e+00 : f32
    %41 = vector.broadcast %cst_40 : f32 to vector<8x32xf32>
    %cst_41 = arith.constant dense<0.000000e+00> : vector<8x32xf32>
    %42 = tpu.matmul %41, %30, %cst_41 {dimension_numbers = #tpu.dot_dimension_numbers<[1], [0], [0], [1], [0, 0, 1, 1], [], []>} : vector<8x32xf32>, vector<32x32xf32>, vector<8x32xf32> -> vector<8x32xf32>
    %43 = vector.broadcast %36 : vector<1x32xf32> to vector<8x32xf32>
    %44 = arith.addf %42, %43 : vector<8x32xf32>
    %cst_42 = arith.constant dense<0.000000e+00> : vector<8x32xf32>
    %45 = tpu.matmul %41, %32, %cst_42 {dimension_numbers = #tpu.dot_dimension_numbers<[1], [0], [0], [1], [0, 0, 1, 1], [], []>} : vector<8x32xf32>, vector<32x32xf32>, vector<8x32xf32> -> vector<8x32xf32>
    %46 = vector.broadcast %38 : vector<1x32xf32> to vector<8x32xf32>
    %47 = arith.addf %45, %46 : vector<8x32xf32>
    %cst_43 = arith.constant dense<0.000000e+00> : vector<8x32xf32>
    %48 = tpu.matmul %41, %34, %cst_43 {dimension_numbers = #tpu.dot_dimension_numbers<[1], [0], [0], [1], [0, 0, 1, 1], [], []>} : vector<8x32xf32>, vector<32x32xf32>, vector<8x32xf32> -> vector<8x32xf32>
    %49 = vector.broadcast %40 : vector<1x32xf32> to vector<8x32xf32>
    %50 = arith.addf %48, %49 : vector<8x32xf32>
    %51 = vector.extract_strided_slice %14 {offsets = [0, 0], sizes = [8, 32], strides = [1, 1]} : vector<64x32xf32> to vector<8x32xf32>
    %52 = arith.addf %51, %44 : vector<8x32xf32>
    %53 = arith.negf %52 : vector<8x32xf32>
    %54 = math.exp %53 : vector<8x32xf32>
    %cst_44 = arith.constant 1.000000e+00 : f32
    %55 = vector.broadcast %cst_44 : f32 to vector<8x32xf32>
    %56 = arith.addf %55, %54 : vector<8x32xf32>
    %57 = arith.divf %55, %56 : vector<8x32xf32>
    %58 = vector.extract_strided_slice %21 {offsets = [0, 0], sizes = [8, 32], strides = [1, 1]} : vector<64x32xf32> to vector<8x32xf32>
    %59 = arith.addf %58, %47 : vector<8x32xf32>
    %60 = arith.negf %59 : vector<8x32xf32>
    %61 = math.exp %60 : vector<8x32xf32>
    %cst_45 = arith.constant 1.000000e+00 : f32
    %62 = vector.broadcast %cst_45 : f32 to vector<8x32xf32>
    %63 = arith.addf %62, %61 : vector<8x32xf32>
    %64 = arith.divf %62, %63 : vector<8x32xf32>
    %65 = vector.extract_strided_slice %28 {offsets = [0, 0], sizes = [8, 32], strides = [1, 1]} : vector<64x32xf32> to vector<8x32xf32>
    %66 = arith.mulf %57, %50 : vector<8x32xf32>
    %67 = arith.addf %65, %66 : vector<8x32xf32>
    %68 = math.tanh %67 : vector<8x32xf32>
    %cst_46 = arith.constant 1.000000e+00 : f32
    %69 = vector.broadcast %cst_46 : f32 to vector<8x32xf32>
    %70 = arith.subf %69, %64 : vector<8x32xf32>
    %71 = arith.mulf %70, %68 : vector<8x32xf32>
    %72 = arith.mulf %64, %41 : vector<8x32xf32>
    %73 = arith.addf %71, %72 : vector<8x32xf32>
    %cst_47 = arith.constant dense<0.000000e+00> : vector<8x32xf32>
    %74 = tpu.matmul %73, %30, %cst_47 {dimension_numbers = #tpu.dot_dimension_numbers<[1], [0], [0], [1], [0, 0, 1, 1], [], []>} : vector<8x32xf32>, vector<32x32xf32>, vector<8x32xf32> -> vector<8x32xf32>
    %75 = vector.broadcast %36 : vector<1x32xf32> to vector<8x32xf32>
    %76 = arith.addf %74, %75 : vector<8x32xf32>
    %cst_48 = arith.constant dense<0.000000e+00> : vector<8x32xf32>
    %77 = tpu.matmul %73, %32, %cst_48 {dimension_numbers = #tpu.dot_dimension_numbers<[1], [0], [0], [1], [0, 0, 1, 1], [], []>} : vector<8x32xf32>, vector<32x32xf32>, vector<8x32xf32> -> vector<8x32xf32>
    %78 = vector.broadcast %38 : vector<1x32xf32> to vector<8x32xf32>
    %79 = arith.addf %77, %78 : vector<8x32xf32>
    %cst_49 = arith.constant dense<0.000000e+00> : vector<8x32xf32>
    %80 = tpu.matmul %73, %34, %cst_49 {dimension_numbers = #tpu.dot_dimension_numbers<[1], [0], [0], [1], [0, 0, 1, 1], [], []>} : vector<8x32xf32>, vector<32x32xf32>, vector<8x32xf32> -> vector<8x32xf32>
    %81 = vector.broadcast %40 : vector<1x32xf32> to vector<8x32xf32>
    %82 = arith.addf %80, %81 : vector<8x32xf32>
    %83 = vector.extract_strided_slice %14 {offsets = [8, 0], sizes = [8, 32], strides = [1, 1]} : vector<64x32xf32> to vector<8x32xf32>
    %84 = arith.addf %83, %76 : vector<8x32xf32>
    %85 = arith.negf %84 : vector<8x32xf32>
    %86 = math.exp %85 : vector<8x32xf32>
    %cst_50 = arith.constant 1.000000e+00 : f32
    %87 = vector.broadcast %cst_50 : f32 to vector<8x32xf32>
    %88 = arith.addf %87, %86 : vector<8x32xf32>
    %89 = arith.divf %87, %88 : vector<8x32xf32>
    %90 = vector.extract_strided_slice %21 {offsets = [8, 0], sizes = [8, 32], strides = [1, 1]} : vector<64x32xf32> to vector<8x32xf32>
    %91 = arith.addf %90, %79 : vector<8x32xf32>
    %92 = arith.negf %91 : vector<8x32xf32>
    %93 = math.exp %92 : vector<8x32xf32>
    %cst_51 = arith.constant 1.000000e+00 : f32
    %94 = vector.broadcast %cst_51 : f32 to vector<8x32xf32>
    %95 = arith.addf %94, %93 : vector<8x32xf32>
    %96 = arith.divf %94, %95 : vector<8x32xf32>
    %97 = vector.extract_strided_slice %28 {offsets = [8, 0], sizes = [8, 32], strides = [1, 1]} : vector<64x32xf32> to vector<8x32xf32>
    %98 = arith.mulf %89, %82 : vector<8x32xf32>
    %99 = arith.addf %97, %98 : vector<8x32xf32>
    %100 = math.tanh %99 : vector<8x32xf32>
    %cst_52 = arith.constant 1.000000e+00 : f32
    %101 = vector.broadcast %cst_52 : f32 to vector<8x32xf32>
    %102 = arith.subf %101, %96 : vector<8x32xf32>
    %103 = arith.mulf %102, %100 : vector<8x32xf32>
    %104 = arith.mulf %96, %73 : vector<8x32xf32>
    %105 = arith.addf %103, %104 : vector<8x32xf32>
    %cst_53 = arith.constant dense<0.000000e+00> : vector<8x32xf32>
    %106 = tpu.matmul %105, %30, %cst_53 {dimension_numbers = #tpu.dot_dimension_numbers<[1], [0], [0], [1], [0, 0, 1, 1], [], []>} : vector<8x32xf32>, vector<32x32xf32>, vector<8x32xf32> -> vector<8x32xf32>
    %107 = vector.broadcast %36 : vector<1x32xf32> to vector<8x32xf32>
    %108 = arith.addf %106, %107 : vector<8x32xf32>
    %cst_54 = arith.constant dense<0.000000e+00> : vector<8x32xf32>
    %109 = tpu.matmul %105, %32, %cst_54 {dimension_numbers = #tpu.dot_dimension_numbers<[1], [0], [0], [1], [0, 0, 1, 1], [], []>} : vector<8x32xf32>, vector<32x32xf32>, vector<8x32xf32> -> vector<8x32xf32>
    %110 = vector.broadcast %38 : vector<1x32xf32> to vector<8x32xf32>
    %111 = arith.addf %109, %110 : vector<8x32xf32>
    %cst_55 = arith.constant dense<0.000000e+00> : vector<8x32xf32>
    %112 = tpu.matmul %105, %34, %cst_55 {dimension_numbers = #tpu.dot_dimension_numbers<[1], [0], [0], [1], [0, 0, 1, 1], [], []>} : vector<8x32xf32>, vector<32x32xf32>, vector<8x32xf32> -> vector<8x32xf32>
    %113 = vector.broadcast %40 : vector<1x32xf32> to vector<8x32xf32>
    %114 = arith.addf %112, %113 : vector<8x32xf32>
    %115 = vector.extract_strided_slice %14 {offsets = [16, 0], sizes = [8, 32], strides = [1, 1]} : vector<64x32xf32> to vector<8x32xf32>
    %116 = arith.addf %115, %108 : vector<8x32xf32>
    %117 = arith.negf %116 : vector<8x32xf32>
    %118 = math.exp %117 : vector<8x32xf32>
    %cst_56 = arith.constant 1.000000e+00 : f32
    %119 = vector.broadcast %cst_56 : f32 to vector<8x32xf32>
    %120 = arith.addf %119, %118 : vector<8x32xf32>
    %121 = arith.divf %119, %120 : vector<8x32xf32>
    %122 = vector.extract_strided_slice %21 {offsets = [16, 0], sizes = [8, 32], strides = [1, 1]} : vector<64x32xf32> to vector<8x32xf32>
    %123 = arith.addf %122, %111 : vector<8x32xf32>
    %124 = arith.negf %123 : vector<8x32xf32>
    %125 = math.exp %124 : vector<8x32xf32>
    %cst_57 = arith.constant 1.000000e+00 : f32
    %126 = vector.broadcast %cst_57 : f32 to vector<8x32xf32>
    %127 = arith.addf %126, %125 : vector<8x32xf32>
    %128 = arith.divf %126, %127 : vector<8x32xf32>
    %129 = vector.extract_strided_slice %28 {offsets = [16, 0], sizes = [8, 32], strides = [1, 1]} : vector<64x32xf32> to vector<8x32xf32>
    %130 = arith.mulf %121, %114 : vector<8x32xf32>
    %131 = arith.addf %129, %130 : vector<8x32xf32>
    %132 = math.tanh %131 : vector<8x32xf32>
    %cst_58 = arith.constant 1.000000e+00 : f32
    %133 = vector.broadcast %cst_58 : f32 to vector<8x32xf32>
    %134 = arith.subf %133, %128 : vector<8x32xf32>
    %135 = arith.mulf %134, %132 : vector<8x32xf32>
    %136 = arith.mulf %128, %105 : vector<8x32xf32>
    %137 = arith.addf %135, %136 : vector<8x32xf32>
    %cst_59 = arith.constant dense<0.000000e+00> : vector<8x32xf32>
    %138 = tpu.matmul %137, %30, %cst_59 {dimension_numbers = #tpu.dot_dimension_numbers<[1], [0], [0], [1], [0, 0, 1, 1], [], []>} : vector<8x32xf32>, vector<32x32xf32>, vector<8x32xf32> -> vector<8x32xf32>
    %139 = vector.broadcast %36 : vector<1x32xf32> to vector<8x32xf32>
    %140 = arith.addf %138, %139 : vector<8x32xf32>
    %cst_60 = arith.constant dense<0.000000e+00> : vector<8x32xf32>
    %141 = tpu.matmul %137, %32, %cst_60 {dimension_numbers = #tpu.dot_dimension_numbers<[1], [0], [0], [1], [0, 0, 1, 1], [], []>} : vector<8x32xf32>, vector<32x32xf32>, vector<8x32xf32> -> vector<8x32xf32>
    %142 = vector.broadcast %38 : vector<1x32xf32> to vector<8x32xf32>
    %143 = arith.addf %141, %142 : vector<8x32xf32>
    %cst_61 = arith.constant dense<0.000000e+00> : vector<8x32xf32>
    %144 = tpu.matmul %137, %34, %cst_61 {dimension_numbers = #tpu.dot_dimension_numbers<[1], [0], [0], [1], [0, 0, 1, 1], [], []>} : vector<8x32xf32>, vector<32x32xf32>, vector<8x32xf32> -> vector<8x32xf32>
    %145 = vector.broadcast %40 : vector<1x32xf32> to vector<8x32xf32>
    %146 = arith.addf %144, %145 : vector<8x32xf32>
    %147 = vector.extract_strided_slice %14 {offsets = [24, 0], sizes = [8, 32], strides = [1, 1]} : vector<64x32xf32> to vector<8x32xf32>
    %148 = arith.addf %147, %140 : vector<8x32xf32>
    %149 = arith.negf %148 : vector<8x32xf32>
    %150 = math.exp %149 : vector<8x32xf32>
    %cst_62 = arith.constant 1.000000e+00 : f32
    %151 = vector.broadcast %cst_62 : f32 to vector<8x32xf32>
    %152 = arith.addf %151, %150 : vector<8x32xf32>
    %153 = arith.divf %151, %152 : vector<8x32xf32>
    %154 = vector.extract_strided_slice %21 {offsets = [24, 0], sizes = [8, 32], strides = [1, 1]} : vector<64x32xf32> to vector<8x32xf32>
    %155 = arith.addf %154, %143 : vector<8x32xf32>
    %156 = arith.negf %155 : vector<8x32xf32>
    %157 = math.exp %156 : vector<8x32xf32>
    %cst_63 = arith.constant 1.000000e+00 : f32
    %158 = vector.broadcast %cst_63 : f32 to vector<8x32xf32>
    %159 = arith.addf %158, %157 : vector<8x32xf32>
    %160 = arith.divf %158, %159 : vector<8x32xf32>
    %161 = vector.extract_strided_slice %28 {offsets = [24, 0], sizes = [8, 32], strides = [1, 1]} : vector<64x32xf32> to vector<8x32xf32>
    %162 = arith.mulf %153, %146 : vector<8x32xf32>
    %163 = arith.addf %161, %162 : vector<8x32xf32>
    %164 = math.tanh %163 : vector<8x32xf32>
    %cst_64 = arith.constant 1.000000e+00 : f32
    %165 = vector.broadcast %cst_64 : f32 to vector<8x32xf32>
    %166 = arith.subf %165, %160 : vector<8x32xf32>
    %167 = arith.mulf %166, %164 : vector<8x32xf32>
    %168 = arith.mulf %160, %137 : vector<8x32xf32>
    %169 = arith.addf %167, %168 : vector<8x32xf32>
    %cst_65 = arith.constant dense<0.000000e+00> : vector<8x32xf32>
    %170 = tpu.matmul %169, %30, %cst_65 {dimension_numbers = #tpu.dot_dimension_numbers<[1], [0], [0], [1], [0, 0, 1, 1], [], []>} : vector<8x32xf32>, vector<32x32xf32>, vector<8x32xf32> -> vector<8x32xf32>
    %171 = vector.broadcast %36 : vector<1x32xf32> to vector<8x32xf32>
    %172 = arith.addf %170, %171 : vector<8x32xf32>
    %cst_66 = arith.constant dense<0.000000e+00> : vector<8x32xf32>
    %173 = tpu.matmul %169, %32, %cst_66 {dimension_numbers = #tpu.dot_dimension_numbers<[1], [0], [0], [1], [0, 0, 1, 1], [], []>} : vector<8x32xf32>, vector<32x32xf32>, vector<8x32xf32> -> vector<8x32xf32>
    %174 = vector.broadcast %38 : vector<1x32xf32> to vector<8x32xf32>
    %175 = arith.addf %173, %174 : vector<8x32xf32>
    %cst_67 = arith.constant dense<0.000000e+00> : vector<8x32xf32>
    %176 = tpu.matmul %169, %34, %cst_67 {dimension_numbers = #tpu.dot_dimension_numbers<[1], [0], [0], [1], [0, 0, 1, 1], [], []>} : vector<8x32xf32>, vector<32x32xf32>, vector<8x32xf32> -> vector<8x32xf32>
    %177 = vector.broadcast %40 : vector<1x32xf32> to vector<8x32xf32>
    %178 = arith.addf %176, %177 : vector<8x32xf32>
    %179 = vector.extract_strided_slice %14 {offsets = [32, 0], sizes = [8, 32], strides = [1, 1]} : vector<64x32xf32> to vector<8x32xf32>
    %180 = arith.addf %179, %172 : vector<8x32xf32>
    %181 = arith.negf %180 : vector<8x32xf32>
    %182 = math.exp %181 : vector<8x32xf32>
    %cst_68 = arith.constant 1.000000e+00 : f32
    %183 = vector.broadcast %cst_68 : f32 to vector<8x32xf32>
    %184 = arith.addf %183, %182 : vector<8x32xf32>
    %185 = arith.divf %183, %184 : vector<8x32xf32>
    %186 = vector.extract_strided_slice %21 {offsets = [32, 0], sizes = [8, 32], strides = [1, 1]} : vector<64x32xf32> to vector<8x32xf32>
    %187 = arith.addf %186, %175 : vector<8x32xf32>
    %188 = arith.negf %187 : vector<8x32xf32>
    %189 = math.exp %188 : vector<8x32xf32>
    %cst_69 = arith.constant 1.000000e+00 : f32
    %190 = vector.broadcast %cst_69 : f32 to vector<8x32xf32>
    %191 = arith.addf %190, %189 : vector<8x32xf32>
    %192 = arith.divf %190, %191 : vector<8x32xf32>
    %193 = vector.extract_strided_slice %28 {offsets = [32, 0], sizes = [8, 32], strides = [1, 1]} : vector<64x32xf32> to vector<8x32xf32>
    %194 = arith.mulf %185, %178 : vector<8x32xf32>
    %195 = arith.addf %193, %194 : vector<8x32xf32>
    %196 = math.tanh %195 : vector<8x32xf32>
    %cst_70 = arith.constant 1.000000e+00 : f32
    %197 = vector.broadcast %cst_70 : f32 to vector<8x32xf32>
    %198 = arith.subf %197, %192 : vector<8x32xf32>
    %199 = arith.mulf %198, %196 : vector<8x32xf32>
    %200 = arith.mulf %192, %169 : vector<8x32xf32>
    %201 = arith.addf %199, %200 : vector<8x32xf32>
    %cst_71 = arith.constant dense<0.000000e+00> : vector<8x32xf32>
    %202 = tpu.matmul %201, %30, %cst_71 {dimension_numbers = #tpu.dot_dimension_numbers<[1], [0], [0], [1], [0, 0, 1, 1], [], []>} : vector<8x32xf32>, vector<32x32xf32>, vector<8x32xf32> -> vector<8x32xf32>
    %203 = vector.broadcast %36 : vector<1x32xf32> to vector<8x32xf32>
    %204 = arith.addf %202, %203 : vector<8x32xf32>
    %cst_72 = arith.constant dense<0.000000e+00> : vector<8x32xf32>
    %205 = tpu.matmul %201, %32, %cst_72 {dimension_numbers = #tpu.dot_dimension_numbers<[1], [0], [0], [1], [0, 0, 1, 1], [], []>} : vector<8x32xf32>, vector<32x32xf32>, vector<8x32xf32> -> vector<8x32xf32>
    %206 = vector.broadcast %38 : vector<1x32xf32> to vector<8x32xf32>
    %207 = arith.addf %205, %206 : vector<8x32xf32>
    %cst_73 = arith.constant dense<0.000000e+00> : vector<8x32xf32>
    %208 = tpu.matmul %201, %34, %cst_73 {dimension_numbers = #tpu.dot_dimension_numbers<[1], [0], [0], [1], [0, 0, 1, 1], [], []>} : vector<8x32xf32>, vector<32x32xf32>, vector<8x32xf32> -> vector<8x32xf32>
    %209 = vector.broadcast %40 : vector<1x32xf32> to vector<8x32xf32>
    %210 = arith.addf %208, %209 : vector<8x32xf32>
    %211 = vector.extract_strided_slice %14 {offsets = [40, 0], sizes = [8, 32], strides = [1, 1]} : vector<64x32xf32> to vector<8x32xf32>
    %212 = arith.addf %211, %204 : vector<8x32xf32>
    %213 = arith.negf %212 : vector<8x32xf32>
    %214 = math.exp %213 : vector<8x32xf32>
    %cst_74 = arith.constant 1.000000e+00 : f32
    %215 = vector.broadcast %cst_74 : f32 to vector<8x32xf32>
    %216 = arith.addf %215, %214 : vector<8x32xf32>
    %217 = arith.divf %215, %216 : vector<8x32xf32>
    %218 = vector.extract_strided_slice %21 {offsets = [40, 0], sizes = [8, 32], strides = [1, 1]} : vector<64x32xf32> to vector<8x32xf32>
    %219 = arith.addf %218, %207 : vector<8x32xf32>
    %220 = arith.negf %219 : vector<8x32xf32>
    %221 = math.exp %220 : vector<8x32xf32>
    %cst_75 = arith.constant 1.000000e+00 : f32
    %222 = vector.broadcast %cst_75 : f32 to vector<8x32xf32>
    %223 = arith.addf %222, %221 : vector<8x32xf32>
    %224 = arith.divf %222, %223 : vector<8x32xf32>
    %225 = vector.extract_strided_slice %28 {offsets = [40, 0], sizes = [8, 32], strides = [1, 1]} : vector<64x32xf32> to vector<8x32xf32>
    %226 = arith.mulf %217, %210 : vector<8x32xf32>
    %227 = arith.addf %225, %226 : vector<8x32xf32>
    %228 = math.tanh %227 : vector<8x32xf32>
    %cst_76 = arith.constant 1.000000e+00 : f32
    %229 = vector.broadcast %cst_76 : f32 to vector<8x32xf32>
    %230 = arith.subf %229, %224 : vector<8x32xf32>
    %231 = arith.mulf %230, %228 : vector<8x32xf32>
    %232 = arith.mulf %224, %201 : vector<8x32xf32>
    %233 = arith.addf %231, %232 : vector<8x32xf32>
    %cst_77 = arith.constant dense<0.000000e+00> : vector<8x32xf32>
    %234 = tpu.matmul %233, %30, %cst_77 {dimension_numbers = #tpu.dot_dimension_numbers<[1], [0], [0], [1], [0, 0, 1, 1], [], []>} : vector<8x32xf32>, vector<32x32xf32>, vector<8x32xf32> -> vector<8x32xf32>
    %235 = vector.broadcast %36 : vector<1x32xf32> to vector<8x32xf32>
    %236 = arith.addf %234, %235 : vector<8x32xf32>
    %cst_78 = arith.constant dense<0.000000e+00> : vector<8x32xf32>
    %237 = tpu.matmul %233, %32, %cst_78 {dimension_numbers = #tpu.dot_dimension_numbers<[1], [0], [0], [1], [0, 0, 1, 1], [], []>} : vector<8x32xf32>, vector<32x32xf32>, vector<8x32xf32> -> vector<8x32xf32>
    %238 = vector.broadcast %38 : vector<1x32xf32> to vector<8x32xf32>
    %239 = arith.addf %237, %238 : vector<8x32xf32>
    %cst_79 = arith.constant dense<0.000000e+00> : vector<8x32xf32>
    %240 = tpu.matmul %233, %34, %cst_79 {dimension_numbers = #tpu.dot_dimension_numbers<[1], [0], [0], [1], [0, 0, 1, 1], [], []>} : vector<8x32xf32>, vector<32x32xf32>, vector<8x32xf32> -> vector<8x32xf32>
    %241 = vector.broadcast %40 : vector<1x32xf32> to vector<8x32xf32>
    %242 = arith.addf %240, %241 : vector<8x32xf32>
    %243 = vector.extract_strided_slice %14 {offsets = [48, 0], sizes = [8, 32], strides = [1, 1]} : vector<64x32xf32> to vector<8x32xf32>
    %244 = arith.addf %243, %236 : vector<8x32xf32>
    %245 = arith.negf %244 : vector<8x32xf32>
    %246 = math.exp %245 : vector<8x32xf32>
    %cst_80 = arith.constant 1.000000e+00 : f32
    %247 = vector.broadcast %cst_80 : f32 to vector<8x32xf32>
    %248 = arith.addf %247, %246 : vector<8x32xf32>
    %249 = arith.divf %247, %248 : vector<8x32xf32>
    %250 = vector.extract_strided_slice %21 {offsets = [48, 0], sizes = [8, 32], strides = [1, 1]} : vector<64x32xf32> to vector<8x32xf32>
    %251 = arith.addf %250, %239 : vector<8x32xf32>
    %252 = arith.negf %251 : vector<8x32xf32>
    %253 = math.exp %252 : vector<8x32xf32>
    %cst_81 = arith.constant 1.000000e+00 : f32
    %254 = vector.broadcast %cst_81 : f32 to vector<8x32xf32>
    %255 = arith.addf %254, %253 : vector<8x32xf32>
    %256 = arith.divf %254, %255 : vector<8x32xf32>
    %257 = vector.extract_strided_slice %28 {offsets = [48, 0], sizes = [8, 32], strides = [1, 1]} : vector<64x32xf32> to vector<8x32xf32>
    %258 = arith.mulf %249, %242 : vector<8x32xf32>
    %259 = arith.addf %257, %258 : vector<8x32xf32>
    %260 = math.tanh %259 : vector<8x32xf32>
    %cst_82 = arith.constant 1.000000e+00 : f32
    %261 = vector.broadcast %cst_82 : f32 to vector<8x32xf32>
    %262 = arith.subf %261, %256 : vector<8x32xf32>
    %263 = arith.mulf %262, %260 : vector<8x32xf32>
    %264 = arith.mulf %256, %233 : vector<8x32xf32>
    %265 = arith.addf %263, %264 : vector<8x32xf32>
    %cst_83 = arith.constant dense<0.000000e+00> : vector<8x32xf32>
    %266 = tpu.matmul %265, %30, %cst_83 {dimension_numbers = #tpu.dot_dimension_numbers<[1], [0], [0], [1], [0, 0, 1, 1], [], []>} : vector<8x32xf32>, vector<32x32xf32>, vector<8x32xf32> -> vector<8x32xf32>
    %267 = vector.broadcast %36 : vector<1x32xf32> to vector<8x32xf32>
    %268 = arith.addf %266, %267 : vector<8x32xf32>
    %cst_84 = arith.constant dense<0.000000e+00> : vector<8x32xf32>
    %269 = tpu.matmul %265, %32, %cst_84 {dimension_numbers = #tpu.dot_dimension_numbers<[1], [0], [0], [1], [0, 0, 1, 1], [], []>} : vector<8x32xf32>, vector<32x32xf32>, vector<8x32xf32> -> vector<8x32xf32>
    %270 = vector.broadcast %38 : vector<1x32xf32> to vector<8x32xf32>
    %271 = arith.addf %269, %270 : vector<8x32xf32>
    %cst_85 = arith.constant dense<0.000000e+00> : vector<8x32xf32>
    %272 = tpu.matmul %265, %34, %cst_85 {dimension_numbers = #tpu.dot_dimension_numbers<[1], [0], [0], [1], [0, 0, 1, 1], [], []>} : vector<8x32xf32>, vector<32x32xf32>, vector<8x32xf32> -> vector<8x32xf32>
    %273 = vector.broadcast %40 : vector<1x32xf32> to vector<8x32xf32>
    %274 = arith.addf %272, %273 : vector<8x32xf32>
    %275 = vector.extract_strided_slice %14 {offsets = [56, 0], sizes = [8, 32], strides = [1, 1]} : vector<64x32xf32> to vector<8x32xf32>
    %276 = arith.addf %275, %268 : vector<8x32xf32>
    %277 = arith.negf %276 : vector<8x32xf32>
    %278 = math.exp %277 : vector<8x32xf32>
    %cst_86 = arith.constant 1.000000e+00 : f32
    %279 = vector.broadcast %cst_86 : f32 to vector<8x32xf32>
    %280 = arith.addf %279, %278 : vector<8x32xf32>
    %281 = arith.divf %279, %280 : vector<8x32xf32>
    %282 = vector.extract_strided_slice %21 {offsets = [56, 0], sizes = [8, 32], strides = [1, 1]} : vector<64x32xf32> to vector<8x32xf32>
    %283 = arith.addf %282, %271 : vector<8x32xf32>
    %284 = arith.negf %283 : vector<8x32xf32>
    %285 = math.exp %284 : vector<8x32xf32>
    %cst_87 = arith.constant 1.000000e+00 : f32
    %286 = vector.broadcast %cst_87 : f32 to vector<8x32xf32>
    %287 = arith.addf %286, %285 : vector<8x32xf32>
    %288 = arith.divf %286, %287 : vector<8x32xf32>
    %289 = vector.extract_strided_slice %28 {offsets = [56, 0], sizes = [8, 32], strides = [1, 1]} : vector<64x32xf32> to vector<8x32xf32>
    %290 = arith.mulf %281, %274 : vector<8x32xf32>
    %291 = arith.addf %289, %290 : vector<8x32xf32>
    %292 = math.tanh %291 : vector<8x32xf32>
    %cst_88 = arith.constant 1.000000e+00 : f32
    %293 = vector.broadcast %cst_88 : f32 to vector<8x32xf32>
    %294 = arith.subf %293, %288 : vector<8x32xf32>
    %295 = arith.mulf %294, %292 : vector<8x32xf32>
    %296 = arith.mulf %288, %265 : vector<8x32xf32>
    %297 = arith.addf %295, %296 : vector<8x32xf32>
    %c0_89 = arith.constant 0 : index
    %c0_90 = arith.constant 0 : index
    %298 = vector.load %arg7[%c0_89, %c0_90] : memref<32x128xf32, #tpu.memory_space<vmem>>, vector<32x128xf32>
    %cst_91 = arith.constant dense<0.000000e+00> : vector<8x128xf32>
    %299 = tpu.matmul %297, %298, %cst_91 {dimension_numbers = #tpu.dot_dimension_numbers<[1], [0], [0], [1], [0, 0, 1, 1], [], []>} : vector<8x32xf32>, vector<32x128xf32>, vector<8x128xf32> -> vector<8x128xf32>
    %c0_92 = arith.constant 0 : index
    %c0_93 = arith.constant 0 : index
    %300 = vector.load %arg8[%c0_92, %c0_93] : memref<1x128xf32, #tpu.memory_space<vmem>>, vector<1x128xf32>
    %301 = vector.broadcast %300 : vector<1x128xf32> to vector<8x128xf32>
    %302 = arith.addf %299, %301 : vector<8x128xf32>
    %c0_94 = arith.constant 0 : index
    %c0_95 = arith.constant 0 : index
    %303 = vector.load %arg9[%c0_94, %c0_95] : memref<8x128xf32, #tpu.memory_space<vmem>>, vector<8x128xf32>
    tpu.vector_store %arg9[%c0_94, %c0_95], %302 {strides = array<i32>} : memref<8x128xf32, #tpu.memory_space<vmem>>, vector<8x128xf32>,
    return
  }
  func.func @transform_0(%arg0: i32) -> (i32, i32) {
    %c0_i32 = arith.constant 0 : i32
    %c0_i32_0 = arith.constant 0 : i32
    %c0_i32_1 = arith.constant 0 : i32
    return %c0_i32, %c0_i32_0 : i32, i32
  }
  func.func @transform_1(%arg0: i32) -> (i32, i32) {
    %c0_i32 = arith.constant 0 : i32
    %c0_i32_0 = arith.constant 0 : i32
    %c0_i32_1 = arith.constant 0 : i32
    return %c0_i32, %c0_i32_0 : i32, i32
  }
  func.func @transform_2(%arg0: i32) -> (i32, i32, i32) {
    %c0_i32 = arith.constant 0 : i32
    %c0_i32_0 = arith.constant 0 : i32
    %c0_i32_1 = arith.constant 0 : i32
    %c0_i32_2 = arith.constant 0 : i32
    return %c0_i32, %c0_i32_0, %c0_i32_1 : i32, i32, i32
  }
  func.func @transform_3(%arg0: i32) -> (i32, i32, i32) {
    %c0_i32 = arith.constant 0 : i32
    %c0_i32_0 = arith.constant 0 : i32
    %c0_i32_1 = arith.constant 0 : i32
    %c0_i32_2 = arith.constant 0 : i32
    return %c0_i32, %c0_i32_0, %c0_i32_1 : i32, i32, i32
  }
  func.func @transform_4(%arg0: i32) -> (i32, i32, i32) {
    %c0_i32 = arith.constant 0 : i32
    %c0_i32_0 = arith.constant 0 : i32
    %c0_i32_1 = arith.constant 0 : i32
    %c0_i32_2 = arith.constant 0 : i32
    return %c0_i32, %c0_i32_0, %c0_i32_1 : i32, i32, i32
  }
  func.func @transform_5(%arg0: i32) -> (i32, i32, i32) {
    %c0_i32 = arith.constant 0 : i32
    %c0_i32_0 = arith.constant 0 : i32
    %c0_i32_1 = arith.constant 0 : i32
    %c0_i32_2 = arith.constant 0 : i32
    return %c0_i32, %c0_i32_0, %c0_i32_1 : i32, i32, i32
  }
  func.func @transform_6(%arg0: i32) -> (i32, i32) {
    %c0_i32 = arith.constant 0 : i32
    %c0_i32_0 = arith.constant 0 : i32
    %c0_i32_1 = arith.constant 0 : i32
    return %c0_i32, %c0_i32_0 : i32, i32
  }
  func.func @transform_7(%arg0: i32) -> (i32, i32) {
    %c0_i32 = arith.constant 0 : i32
    %c0_i32_0 = arith.constant 0 : i32
    %c0_i32_1 = arith.constant 0 : i32
    return %c0_i32, %c0_i32_0 : i32, i32
  }
  func.func @transform_8(%arg0: i32) -> (i32, i32) {
    %c0_i32 = arith.constant 0 : i32
    %c0_i32_0 = arith.constant 0 : i32
    %c0_i32_1 = arith.constant 0 : i32
    return %c0_i32, %c0_i32_0 : i32, i32
  }
}

</mosaic_0001>

<llo_original>
// kernel: ball_predictor_forward.1
$region0: #{ball_predictor_forward.1}
  #allocation0 [shape = 'u32[]', space=smem, size = 0x4, offset = 0x4, fixed_abs, tag = 'smem constant byte address 0x4 - core index']
  #allocation1 [shape = 'u32[144,128]{1,0:T(1,128)}', space=vmem, size = 0x12000, scoped, tag = 'internal scratch']
  %s0 = inlined_call_operand.vmem [shape: s32[64,1], index: 0, kind: input, shape index: {}]
  %s1 = inlined_call_operand.vmem [shape: f32[8,16], index: 1, kind: input, shape index: {}]
  %s2 = inlined_call_operand.vmem [shape: f32[3,16,32], index: 2, kind: input, shape index: {}]
  %s3 = inlined_call_operand.vmem [shape: f32[3,32,32], index: 3, kind: input, shape index: {}]
  %s4 = inlined_call_operand.vmem [shape: f32[3,1,32], index: 4, kind: input, shape index: {}]
  %s5 = inlined_call_operand.vmem [shape: f32[3,1,32], index: 5, kind: input, shape index: {}]
  %s6 = inlined_call_operand.vmem [shape: f32[32,128], index: 6, kind: input, shape index: {}]
  %s7 = inlined_call_operand.vmem [shape: f32[1,128], index: 7, kind: input, shape index: {}]
  %s8 = inlined_call_operand.vmem [shape: f32[8,128], index: 8, kind: output, shape index: {}]
  %s9 = sld [smem:[#allocation0]]
  $region42: #{ball_predictor_forward.1} parent=0
    _
  %s11 = ssub.s32 1, %s9
  %s12 = scalar_select 0, %s11, %s9
  // Predicated region
  $region2: #{ball_predictor_forward.1} parent=0 // pred_check
    _
  $region3: #{ball_predictor_forward.1} parent=0 // pred_check_branch
    %14 = sbr.rel (0) target = $region5
  $region4: #{ball_predictor_forward.1} parent=0 // pred_region
    _
  $region5: #{ball_predictor_forward.1} parent=0 // pred_fallthru
    _
  // Predicated region
  $region6: #{ball_predictor_forward.1} parent=0 // pred_check
    _
  $region7: #{ball_predictor_forward.1} parent=0 // pred_check_branch
    %16 = sbr.rel (0) target = $region9
  $region8: #{ball_predictor_forward.1} parent=0 // pred_region
    _
  $region9: #{ball_predictor_forward.1} parent=0 // pred_fallthru
    _
  // Predicated region
  $region10: #{ball_predictor_forward.1} parent=0 // pred_check
    _
  $region11: #{ball_predictor_forward.1} parent=0 // pred_check_branch
    %18 = sbr.rel (0) target = $region13
  $region12: #{ball_predictor_forward.1} parent=0 // pred_region
    _
  $region13: #{ball_predictor_forward.1} parent=0 // pred_fallthru
    _
  // Predicated region
  $region14: #{ball_predictor_forward.1} parent=0 // pred_check
    _
  $region15: #{ball_predictor_forward.1} parent=0 // pred_check_branch
    %20 = sbr.rel (0) target = $region17
  $region16: #{ball_predictor_forward.1} parent=0 // pred_region
    _
  $region17: #{ball_predictor_forward.1} parent=0 // pred_fallthru
    _
  // Predicated region
  $region18: #{ball_predictor_forward.1} parent=0 // pred_check
    _
  $region19: #{ball_predictor_forward.1} parent=0 // pred_check_branch
    %22 = sbr.rel (0) target = $region21
  $region20: #{ball_predictor_forward.1} parent=0 // pred_region
    _
  $region21: #{ball_predictor_forward.1} parent=0 // pred_fallthru
    _
  // Predicated region
  $region22: #{ball_predictor_forward.1} parent=0 // pred_check
    _
  $region23: #{ball_predictor_forward.1} parent=0 // pred_check_branch
    %24 = sbr.rel (0) target = $region25
  $region24: #{ball_predictor_forward.1} parent=0 // pred_region
    _
  $region25: #{ball_predictor_forward.1} parent=0 // pred_fallthru
    _
  // Predicated region
  $region26: #{ball_predictor_forward.1} parent=0 // pred_check
    _
  $region27: #{ball_predictor_forward.1} parent=0 // pred_check_branch
    %26 = sbr.rel (0) target = $region29
  $region28: #{ball_predictor_forward.1} parent=0 // pred_region
    _
  $region29: #{ball_predictor_forward.1} parent=0 // pred_fallthru
    _
  // Predicated region
  $region30: #{ball_predictor_forward.1} parent=0 // pred_check
    _
  $region31: #{ball_predictor_forward.1} parent=0 // pred_check_branch
    %28 = sbr.rel (0) target = $region33
  $region32: #{ball_predictor_forward.1} parent=0 // pred_region
    _
  $region33: #{ball_predictor_forward.1} parent=0 // pred_fallthru
    _
  %v29 = vld [vmem:[%s0] sm:$0xff]
  %v30 = vld [vmem:[%s0 + $0x8] sm:$0xff]
  %v31 = vld [vmem:[%s0 + $0x10] sm:$0xff]
  %v32 = vld [vmem:[%s0 + $0x18] sm:$0xff]
  %v33 = vld [vmem:[%s0 + $0x20] sm:$0xff]
  %v34 = vld [vmem:[%s0 + $0x28] sm:$0xff]
  %v35 = vld [vmem:[%s0 + $0x30] sm:$0xff]
  %v36 = vld [vmem:[%s0 + $0x38] sm:$0xff]
  %v37 = vlaneseq
  %v38 = vand.u32 %v37, 127
  %39 = vset.pattern.permute.xlu0 0
  %40 = vperm.xlu0 %39, %v29
  %v41 = vpop.permute.xlu0 %40
  %42 = vset.pattern.permute.xlu0 0
  %43 = vperm.xlu0 %42, %v30
  %v44 = vpop.permute.xlu0 %43
  %45 = vset.pattern.permute.xlu0 0
  %46 = vperm.xlu0 %45, %v31
  %v47 = vpop.permute.xlu0 %46
  %48 = vset.pattern.permute.xlu0 0
  %49 = vperm.xlu0 %48, %v32
  %v50 = vpop.permute.xlu0 %49
  %51 = vset.pattern.permute.xlu0 0
  %52 = vperm.xlu0 %51, %v33
  %v53 = vpop.permute.xlu0 %52
  %54 = vset.pattern.permute.xlu0 0
  %55 = vperm.xlu0 %54, %v34
  %v56 = vpop.permute.xlu0 %55
  %57 = vset.pattern.permute.xlu0 0
  %58 = vperm.xlu0 %57, %v35
  %v59 = vpop.permute.xlu0 %58
  %60 = vset.pattern.permute.xlu0 0
  %61 = vperm.xlu0 %60, %v36
  %v62 = vpop.permute.xlu0 %61
  %vm63 = vcmp.eq.s32.totalorder %v41, %v38
  %vm64 = vcmp.eq.s32.totalorder %v44, %v38
  %vm65 = vcmp.eq.s32.totalorder %v47, %v38
  %vm66 = vcmp.eq.s32.totalorder %v50, %v38
  %vm67 = vcmp.eq.s32.totalorder %v53, %v38
  %vm68 = vcmp.eq.s32.totalorder %v56, %v38
  %vm69 = vcmp.eq.s32.totalorder %v59, %v38
  %vm70 = vcmp.eq.s32.totalorder %v62, %v38
  %v71 = vsel %vm63, 1, 0
  %v72 = vsel %vm64, 1, 0
  %v73 = vsel %vm65, 1, 0
  %v74 = vsel %vm66, 1, 0
  %v75 = vsel %vm67, 1, 0
  %v76 = vsel %vm68, 1, 0
  %v77 = vsel %vm69, 1, 0
  %v78 = vsel %vm70, 1, 0
  %v79 = vcvt.s32.f32 %v71
  %v80 = vcvt.s32.f32 %v72
  %v81 = vcvt.s32.f32 %v73
  %v82 = vcvt.s32.f32 %v74
  %v83 = vcvt.s32.f32 %v75
  %v84 = vcvt.s32.f32 %v76
  %v85 = vcvt.s32.f32 %v77
  %v86 = vcvt.s32.f32 %v78
  %v87 = vld [vmem:[%s1] sm:$0xff]
  %vm88 = vcmask 64512
  %v90 = vsel %vm88, %v79, 0
  %v93 = vsel %vm88, %v80, 0
  %v96 = vsel %vm88, %v81, 0
  %v99 = vsel %vm88, %v82, 0
  %v102 = vsel %vm88, %v83, 0
  %v105 = vsel %vm88, %v84, 0
  %v108 = vsel %vm88, %v85, 0
  %v111 = vsel %vm88, %v86, 0
  %113 = vmatprep.subr.mxu0 0.0
  %114 = vmatpush1.msra.mxu0 0.0
  %115 = vmatprep.subr.mxu0 0.0
  %116 = vmatpush1.msra.mxu0 0.0
  %117 = vmatprep.subr.mxu0 0.0
  %118 = vmatpush1.msra.mxu0 0.0
  %119 = vmatprep.subr.mxu0 0.0
  %120 = vmatpush1.msra.mxu0 0.0
  %121 = vmatprep.subr.mxu0 0.0
  %122 = vmatpush1.msra.mxu0 0.0
  %123 = vmatprep.subr.mxu0 0.0
  %124 = vmatpush1.msra.mxu0 0.0
  %125 = vmatprep.subr.mxu0 0.0
  %126 = vmatpush1.msra.mxu0 0.0
  %127 = vmatprep.subr.mxu0 0.0
  %128 = vmatpush1.msra.mxu0 0.0
  %129 = vmatprep.subr.mxu0 0.0
  %130 = vmatpush1.msra.mxu0 0.0
  %131 = vmatprep.subr.mxu0 0.0
  %132 = vmatpush1.msra.mxu0 0.0
  %133 = vmatprep.subr.mxu0 0.0
  %134 = vmatpush1.msra.mxu0 0.0
  %135 = vmatprep.subr.mxu0 0.0
  %136 = vmatpush1.msra.mxu0 0.0
  %137 = vmatprep.subr.mxu0 0.0
  %138 = vmatpush1.msra.mxu0 0.0
  %139 = vmatprep.subr.mxu0 0.0
  %140 = vmatpush1.msra.mxu0 0.0
  %141 = vmatprep.subr.mxu0 0.0
  %142 = vmatpush1.msra.mxu0 0.0
  %143 = vmatprep.subr.mxu0 0.0
  %144 = vmatpush1.msra.mxu0 %v87
  %145 = vmatprep.subr.mxu0 0.0
  %146 = vmatpush2.msra.mxu0 0.0
  %147 = vmatprep.subr.mxu0 0.0
  %148 = vmatpush2.msra.mxu0 0.0
  %149 = vmatprep.subr.mxu0 0.0
  %150 = vmatpush2.msra.mxu0 0.0
  %151 = vmatprep.subr.mxu0 0.0
  %152 = vmatpush2.msra.mxu0 0.0
  %153 = vmatprep.subr.mxu0 0.0
  %154 = vmatpush2.msra.mxu0 0.0
  %155 = vmatprep.subr.mxu0 0.0
  %156 = vmatpush2.msra.mxu0 0.0
  %157 = vmatprep.subr.mxu0 0.0
  %158 = vmatpush2.msra.mxu0 0.0
  %159 = vmatprep.subr.mxu0 0.0
  %160 = vmatpush2.msra.mxu0 0.0
  %161 = vmatprep.subr.mxu0 0.0
  %162 = vmatpush2.msra.mxu0 0.0
  %163 = vmatprep.subr.mxu0 0.0
  %164 = vmatpush2.msra.mxu0 0.0
  %165 = vmatprep.subr.mxu0 0.0
  %166 = vmatpush2.msra.mxu0 0.0
  %167 = vmatprep.subr.mxu0 0.0
  %168 = vmatpush2.msra.mxu0 0.0
  %169 = vmatprep.subr.mxu0 0.0
  %170 = vmatpush2.msra.mxu0 0.0
  %171 = vmatprep.subr.mxu0 0.0
  %172 = vmatpush2.msra.mxu0 0.0
  %173 = vmatprep.subr.mxu0 0.0
  %174 = vmatpush2.msra.mxu0 0.0
  %175 = vmatprep.subr.mxu0 0.0
  %176 = vmatpush2.msra.mxu0 0.0
  %177 = vmatprep.mubr.f32.mxu0 0.0
  %178 = vmatmul.mubr.f32.gmra.mxu0 %v90
  %v179 = vpop.f32.mrf.mxu0
  %v180 = vadd.f32 0.0, %v179
  %v181 = vpop.f32.mrf.mxu0
  %182 = vmatprep.mubr.f32.mxu0 0.0
  %183 = vmatmul.mubr.f32.gmra.mxu0 %v93
  %v184 = vpop.f32.mrf.mxu0
  %v185 = vadd.f32 0.0, %v184
  %v186 = vpop.f32.mrf.mxu0
  %187 = vmatprep.mubr.f32.mxu0 0.0
  %188 = vmatmul.mubr.f32.gmra.mxu0 %v96
  %v189 = vpop.f32.mrf.mxu0
  %v190 = vadd.f32 0.0, %v189
  %v191 = vpop.f32.mrf.mxu0
  %192 = vmatprep.mubr.f32.mxu0 0.0
  %193 = vmatmul.mubr.f32.gmra.mxu0 %v99
  %v194 = vpop.f32.mrf.mxu0
  %v195 = vadd.f32 0.0, %v194
  %v196 = vpop.f32.mrf.mxu0
  %197 = vmatprep.mubr.f32.mxu0 0.0
  %198 = vmatmul.mubr.f32.gmra.mxu0 %v102
  %v199 = vpop.f32.mrf.mxu0
  %v200 = vadd.f32 0.0, %v199
  %v201 = vpop.f32.mrf.mxu0
  %202 = vmatprep.mubr.f32.mxu0 0.0
  %203 = vmatmul.mubr.f32.gmra.mxu0 %v105
  %v204 = vpop.f32.mrf.mxu0
  %v205 = vadd.f32 0.0, %v204
  %v206 = vpop.f32.mrf.mxu0
  %207 = vmatprep.mubr.f32.mxu0 0.0
  %208 = vmatmul.mubr.f32.gmra.mxu0 %v108
  %v209 = vpop.f32.mrf.mxu0
  %v210 = vadd.f32 0.0, %v209
  %v211 = vpop.f32.mrf.mxu0
  %212 = vmatprep.mubr.f32.mxu0 0.0
  %213 = vmatmul.mubr.f32.gmra.mxu0 %v111
  %v214 = vpop.f32.mrf.mxu0
  %v215 = vadd.f32 0.0, %v214
  %v216 = vpop.f32.mrf.mxu0
  %217 = vdwg.mxu0
  %v218 = vld [vmem:[%s2] sm:$0xff]
  %v219 = vld [vmem:[%s2 + $0x8] sm:$0xff]
  %v220 = vld [vmem:[%s4] sm:$0x1]
  %v222 = vlaneseq
  %v223 = vshrl.u32 %v222, 7
  %v224 = vsub.s32 0, %v223
  %v225 = vrot.slane %v220, %v224
  %vm227 = vcmask 130048
  %v229 = vsel %vm227, %v180, 0
  %v232 = vsel %vm227, %v185, 0
  %v235 = vsel %vm227, %v190, 0
  %v238 = vsel %vm227, %v195, 0
  %v241 = vsel %vm227, %v200, 0
  %v244 = vsel %vm227, %v205, 0
  %v247 = vsel %vm227, %v210, 0
  %v250 = vsel %vm227, %v215, 0
  %252 = vmatprep.subr.mxu0 0.0
  %253 = vmatpush1.msra.mxu0 0.0
  %254 = vmatprep.subr.mxu0 0.0
  %255 = vmatpush1.msra.mxu0 0.0
  %256 = vmatprep.subr.mxu0 0.0
  %257 = vmatpush1.msra.mxu0 0.0
  %258 = vmatprep.subr.mxu0 0.0
  %259 = vmatpush1.msra.mxu0 0.0
  %260 = vmatprep.subr.mxu0 0.0
  %261 = vmatpush1.msra.mxu0 0.0
  %262 = vmatprep.subr.mxu0 0.0
  %263 = vmatpush1.msra.mxu0 0.0
  %264 = vmatprep.subr.mxu0 0.0
  %265 = vmatpush1.msra.mxu0 0.0
  %266 = vmatprep.subr.mxu0 0.0
  %267 = vmatpush1.msra.mxu0 0.0
  %268 = vmatprep.subr.mxu0 0.0
  %269 = vmatpush1.msra.mxu0 0.0
  %270 = vmatprep.subr.mxu0 0.0
  %271 = vmatpush1.msra.mxu0 0.0
  %272 = vmatprep.subr.mxu0 0.0
  %273 = vmatpush1.msra.mxu0 0.0
  %274 = vmatprep.subr.mxu0 0.0
  %275 = vmatpush1.msra.mxu0 0.0
  %276 = vmatprep.subr.mxu0 0.0
  %277 = vmatpush1.msra.mxu0 0.0
  %278 = vmatprep.subr.mxu0 0.0
  %279 = vmatpush1.msra.mxu0 0.0
  %280 = vmatprep.subr.mxu0 0.0
  %281 = vmatpush1.msra.mxu0 %v219
  %282 = vmatprep.subr.mxu0 0.0
  %283 = vmatpush1.msra.mxu0 %v218
  %284 = vmatprep.subr.mxu0 0.0
  %285 = vmatpush2.msra.mxu0 0.0
  %286 = vmatprep.subr.mxu0 0.0
  %287 = vmatpush2.msra.mxu0 0.0
  %288 = vmatprep.subr.mxu0 0.0
  %289 = vmatpush2.msra.mxu0 0.0
  %290 = vmatprep.subr.mxu0 0.0
  %291 = vmatpush2.msra.mxu0 0.0
  %292 = vmatprep.subr.mxu0 0.0
  %293 = vmatpush2.msra.mxu0 0.0
  %294 = vmatprep.subr.mxu0 0.0
  %295 = vmatpush2.msra.mxu0 0.0
  %296 = vmatprep.subr.mxu0 0.0
  %297 = vmatpush2.msra.mxu0 0.0
  %298 = vmatprep.subr.mxu0 0.0
  %299 = vmatpush2.msra.mxu0 0.0
  %300 = vmatprep.subr.mxu0 0.0
  %301 = vmatpush2.msra.mxu0 0.0
  %302 = vmatprep.subr.mxu0 0.0
  %303 = vmatpush2.msra.mxu0 0.0
  %304 = vmatprep.subr.mxu0 0.0
  %305 = vmatpush2.msra.mxu0 0.0
  %306 = vmatprep.subr.mxu0 0.0
  %307 = vmatpush2.msra.mxu0 0.0
  %308 = vmatprep.subr.mxu0 0.0
  %309 = vmatpush2.msra.mxu0 0.0
  %310 = vmatprep.subr.mxu0 0.0
  %311 = vmatpush2.msra.mxu0 0.0
  %312 = vmatprep.subr.mxu0 0.0
  %313 = vmatpush2.msra.mxu0 0.0
  %314 = vmatprep.subr.mxu0 0.0
  %315 = vmatpush2.msra.mxu0 0.0
  %316 = vmatprep.mubr.f32.mxu0 0.0
  %317 = vmatmul.mubr.f32.gmra.mxu0 %v229
  %v318 = vpop.f32.mrf.mxu0
  %v319 = vadd.f32 %v225, %v318
  %v320 = vpop.f32.mrf.mxu0
  %321 = vmatprep.mubr.f32.mxu0 0.0
  %322 = vmatmul.mubr.f32.gmra.mxu0 %v232
  %v323 = vpop.f32.mrf.mxu0
  %v324 = vadd.f32 %v225, %v323
  %v325 = vpop.f32.mrf.mxu0
  %326 = vmatprep.mubr.f32.mxu0 0.0
  %327 = vmatmul.mubr.f32.gmra.mxu0 %v235
  %v328 = vpop.f32.mrf.mxu0
  %v329 = vadd.f32 %v225, %v328
  %v330 = vpop.f32.mrf.mxu0
  %331 = vmatprep.mubr.f32.mxu0 0.0
  %332 = vmatmul.mubr.f32.gmra.mxu0 %v238
  %v333 = vpop.f32.mrf.mxu0
  %v334 = vadd.f32 %v225, %v333
  %v335 = vpop.f32.mrf.mxu0
  %336 = vmatprep.mubr.f32.mxu0 0.0
  %337 = vmatmul.mubr.f32.gmra.mxu0 %v241
  %v338 = vpop.f32.mrf.mxu0
  %v339 = vadd.f32 %v225, %v338
  %v340 = vpop.f32.mrf.mxu0
  %341 = vmatprep.mubr.f32.mxu0 0.0
  %342 = vmatmul.mubr.f32.gmra.mxu0 %v244
  %v343 = vpop.f32.mrf.mxu0
  %v344 = vadd.f32 %v225, %v343
  %v345 = vpop.f32.mrf.mxu0
  %346 = vmatprep.mubr.f32.mxu0 0.0
  %347 = vmatmul.mubr.f32.gmra.mxu0 %v247
  %v348 = vpop.f32.mrf.mxu0
  %v349 = vadd.f32 %v225, %v348
  %v350 = vpop.f32.mrf.mxu0
  %351 = vmatprep.mubr.f32.mxu0 0.0
  %352 = vmatmul.mubr.f32.gmra.mxu0 %v250
  %v353 = vpop.f32.mrf.mxu0
  %v354 = vadd.f32 %v225, %v353
  %v355 = vpop.f32.mrf.mxu0
  %356 = vdwg.mxu0
  %s357 = scalar_lea.vmem %s2, 16
  %v358 = vld [vmem:[%s357] sm:$0xff]
  %v359 = vld [vmem:[%s357 + $0x8] sm:$0xff]
  %s360 = scalar_lea.vmem %s4, 1
  %v361 = vld [vmem:[%s360] sm:$0x1]
  %v363 = vlaneseq
  %v364 = vshrl.u32 %v363, 7
  %v365 = vsub.s32 0, %v364
  %v366 = vrot.slane %v361, %v365
  %368 = vmatprep.subr.mxu0 0.0
  %369 = vmatpush1.msra.mxu0 0.0
  %370 = vmatprep.subr.mxu0 0.0
  %371 = vmatpush1.msra.mxu0 0.0
  %372 = vmatprep.subr.mxu0 0.0
  %373 = vmatpush1.msra.mxu0 0.0
  %374 = vmatprep.subr.mxu0 0.0
  %375 = vmatpush1.msra.mxu0 0.0
  %376 = vmatprep.subr.mxu0 0.0
  %377 = vmatpush1.msra.mxu0 0.0
  %378 = vmatprep.subr.mxu0 0.0
  %379 = vmatpush1.msra.mxu0 0.0
  %380 = vmatprep.subr.mxu0 0.0
  %381 = vmatpush1.msra.mxu0 0.0
  %382 = vmatprep.subr.mxu0 0.0
  %383 = vmatpush1.msra.mxu0 0.0
  %384 = vmatprep.subr.mxu0 0.0
  %385 = vmatpush1.msra.mxu0 0.0
  %386 = vmatprep.subr.mxu0 0.0
  %387 = vmatpush1.msra.mxu0 0.0
  %388 = vmatprep.subr.mxu0 0.0
  %389 = vmatpush1.msra.mxu0 0.0
  %390 = vmatprep.subr.mxu0 0.0
  %391 = vmatpush1.msra.mxu0 0.0
  %392 = vmatprep.subr.mxu0 0.0
  %393 = vmatpush1.msra.mxu0 0.0
  %394 = vmatprep.subr.mxu0 0.0
  %395 = vmatpush1.msra.mxu0 0.0
  %396 = vmatprep.subr.mxu0 0.0
  %397 = vmatpush1.msra.mxu0 %v359
  %398 = vmatprep.subr.mxu0 0.0
  %399 = vmatpush1.msra.mxu0 %v358
  %400 = vmatprep.subr.mxu0 0.0
  %401 = vmatpush2.msra.mxu0 0.0
  %402 = vmatprep.subr.mxu0 0.0
  %403 = vmatpush2.msra.mxu0 0.0
  %404 = vmatprep.subr.mxu0 0.0
  %405 = vmatpush2.msra.mxu0 0.0
  %406 = vmatprep.subr.mxu0 0.0
  %407 = vmatpush2.msra.mxu0 0.0
  %408 = vmatprep.subr.mxu0 0.0
  %409 = vmatpush2.msra.mxu0 0.0
  %410 = vmatprep.subr.mxu0 0.0
  %411 = vmatpush2.msra.mxu0 0.0
  %412 = vmatprep.subr.mxu0 0.0
  %413 = vmatpush2.msra.mxu0 0.0
  %414 = vmatprep.subr.mxu0 0.0
  %415 = vmatpush2.msra.mxu0 0.0
  %416 = vmatprep.subr.mxu0 0.0
  %417 = vmatpush2.msra.mxu0 0.0
  %418 = vmatprep.subr.mxu0 0.0
  %419 = vmatpush2.msra.mxu0 0.0
  %420 = vmatprep.subr.mxu0 0.0
  %421 = vmatpush2.msra.mxu0 0.0
  %422 = vmatprep.subr.mxu0 0.0
  %423 = vmatpush2.msra.mxu0 0.0
  %424 = vmatprep.subr.mxu0 0.0
  %425 = vmatpush2.msra.mxu0 0.0
  %426 = vmatprep.subr.mxu0 0.0
  %427 = vmatpush2.msra.mxu0 0.0
  %428 = vmatprep.subr.mxu0 0.0
  %429 = vmatpush2.msra.mxu0 0.0
  %430 = vmatprep.subr.mxu0 0.0
  %431 = vmatpush2.msra.mxu0 0.0
  %432 = vmatprep.mubr.f32.mxu0 0.0
  %433 = vmatmul.mubr.f32.gmra.mxu0 %v229
  %v434 = vpop.f32.mrf.mxu0
  %v435 = vadd.f32 %v366, %v434
  %v436 = vpop.f32.mrf.mxu0
  %437 = vmatprep.mubr.f32.mxu0 0.0
  %438 = vmatmul.mubr.f32.gmra.mxu0 %v232
  %v439 = vpop.f32.mrf.mxu0
  %v440 = vadd.f32 %v366, %v439
  %v441 = vpop.f32.mrf.mxu0
  %442 = vmatprep.mubr.f32.mxu0 0.0
  %443 = vmatmul.mubr.f32.gmra.mxu0 %v235
  %v444 = vpop.f32.mrf.mxu0
  %v445 = vadd.f32 %v366, %v444
  %v446 = vpop.f32.mrf.mxu0
  %447 = vmatprep.mubr.f32.mxu0 0.0
  %448 = vmatmul.mubr.f32.gmra.mxu0 %v238
  %v449 = vpop.f32.mrf.mxu0
  %v450 = vadd.f32 %v366, %v449
  %v451 = vpop.f32.mrf.mxu0
  %452 = vmatprep.mubr.f32.mxu0 0.0
  %453 = vmatmul.mubr.f32.gmra.mxu0 %v241
  %v454 = vpop.f32.mrf.mxu0
  %v455 = vadd.f32 %v366, %v454
  %v456 = vpop.f32.mrf.mxu0
  %457 = vmatprep.mubr.f32.mxu0 0.0
  %458 = vmatmul.mubr.f32.gmra.mxu0 %v244
  %v459 = vpop.f32.mrf.mxu0
  %v460 = vadd.f32 %v366, %v459
  %v461 = vpop.f32.mrf.mxu0
  %462 = vmatprep.mubr.f32.mxu0 0.0
  %463 = vmatmul.mubr.f32.gmra.mxu0 %v247
  %v464 = vpop.f32.mrf.mxu0
  %v465 = vadd.f32 %v366, %v464
  %v466 = vpop.f32.mrf.mxu0
  %467 = vmatprep.mubr.f32.mxu0 0.0
  %468 = vmatmul.mubr.f32.gmra.mxu0 %v250
  %v469 = vpop.f32.mrf.mxu0
  %v470 = vadd.f32 %v366, %v469
  %v471 = vpop.f32.mrf.mxu0
  %472 = vdwg.mxu0
  %s473 = scalar_lea.vmem %s2, 32
  %v474 = vld [vmem:[%s473] sm:$0xff]
  %v475 = vld [vmem:[%s473 + $0x8] sm:$0xff]
  %s476 = scalar_lea.vmem %s4, 2
  %v477 = vld [vmem:[%s476] sm:$0x1]
  %v479 = vlaneseq
  %v480 = vshrl.u32 %v479, 7
  %v481 = vsub.s32 0, %v480
  %v482 = vrot.slane %v477, %v481
  %484 = vmatprep.subr.mxu0 0.0
  %485 = vmatpush1.msra.mxu0 0.0
  %486 = vmatprep.subr.mxu0 0.0
  %487 = vmatpush1.msra.mxu0 0.0
  %488 = vmatprep.subr.mxu0 0.0
  %489 = vmatpush1.msra.mxu0 0.0
  %490 = vmatprep.subr.mxu0 0.0
  %491 = vmatpush1.msra.mxu0 0.0
  %492 = vmatprep.subr.mxu0 0.0
  %493 = vmatpush1.msra.mxu0 0.0
  %494 = vmatprep.subr.mxu0 0.0
  %495 = vmatpush1.msra.mxu0 0.0
  %496 = vmatprep.subr.mxu0 0.0
  %497 = vmatpush1.msra.mxu0 0.0
  %498 = vmatprep.subr.mxu0 0.0
  %499 = vmatpush1.msra.mxu0 0.0
  %500 = vmatprep.subr.mxu0 0.0
  %501 = vmatpush1.msra.mxu0 0.0
  %502 = vmatprep.subr.mxu0 0.0
  %503 = vmatpush1.msra.mxu0 0.0
  %504 = vmatprep.subr.mxu0 0.0
  %505 = vmatpush1.msra.mxu0 0.0
  %506 = vmatprep.subr.mxu0 0.0
  %507 = vmatpush1.msra.mxu0 0.0
  %508 = vmatprep.subr.mxu0 0.0
  %509 = vmatpush1.msra.mxu0 0.0
  %510 = vmatprep.subr.mxu0 0.0
  %511 = vmatpush1.msra.mxu0 0.0
  %512 = vmatprep.subr.mxu0 0.0
  %513 = vmatpush1.msra.mxu0 %v475
  %514 = vmatprep.subr.mxu0 0.0
  %515 = vmatpush1.msra.mxu0 %v474
  %516 = vmatprep.subr.mxu0 0.0
  %517 = vmatpush2.msra.mxu0 0.0
  %518 = vmatprep.subr.mxu0 0.0
  %519 = vmatpush2.msra.mxu0 0.0
  %520 = vmatprep.subr.mxu0 0.0
  %521 = vmatpush2.msra.mxu0 0.0
  %522 = vmatprep.subr.mxu0 0.0
  %523 = vmatpush2.msra.mxu0 0.0
  %524 = vmatprep.subr.mxu0 0.0
  %525 = vmatpush2.msra.mxu0 0.0
  %526 = vmatprep.subr.mxu0 0.0
  %527 = vmatpush2.msra.mxu0 0.0
  %528 = vmatprep.subr.mxu0 0.0
  %529 = vmatpush2.msra.mxu0 0.0
  %530 = vmatprep.subr.mxu0 0.0
  %531 = vmatpush2.msra.mxu0 0.0
  %532 = vmatprep.subr.mxu0 0.0
  %533 = vmatpush2.msra.mxu0 0.0
  %534 = vmatprep.subr.mxu0 0.0
  %535 = vmatpush2.msra.mxu0 0.0
  %536 = vmatprep.subr.mxu0 0.0
  %537 = vmatpush2.msra.mxu0 0.0
  %538 = vmatprep.subr.mxu0 0.0
  %539 = vmatpush2.msra.mxu0 0.0
  %540 = vmatprep.subr.mxu0 0.0
  %541 = vmatpush2.msra.mxu0 0.0
  %542 = vmatprep.subr.mxu0 0.0
  %543 = vmatpush2.msra.mxu0 0.0
  %544 = vmatprep.subr.mxu0 0.0
  %545 = vmatpush2.msra.mxu0 0.0
  %546 = vmatprep.subr.mxu0 0.0
  %547 = vmatpush2.msra.mxu0 0.0
  %548 = vmatprep.mubr.f32.mxu0 0.0
  %549 = vmatmul.mubr.f32.gmra.mxu0 %v229
  %v550 = vpop.f32.mrf.mxu0
  %v551 = vadd.f32 %v482, %v550
  %v552 = vpop.f32.mrf.mxu0
  %553 = vmatprep.mubr.f32.mxu0 0.0
  %554 = vmatmul.mubr.f32.gmra.mxu0 %v232
  %v555 = vpop.f32.mrf.mxu0
  %v556 = vadd.f32 %v482, %v555
  %v557 = vpop.f32.mrf.mxu0
  %558 = vmatprep.mubr.f32.mxu0 0.0
  %559 = vmatmul.mubr.f32.gmra.mxu0 %v235
  %v560 = vpop.f32.mrf.mxu0
  %v561 = vadd.f32 %v482, %v560
  %v562 = vpop.f32.mrf.mxu0
  %563 = vmatprep.mubr.f32.mxu0 0.0
  %564 = vmatmul.mubr.f32.gmra.mxu0 %v238
  %v565 = vpop.f32.mrf.mxu0
  %v566 = vadd.f32 %v482, %v565
  %v567 = vpop.f32.mrf.mxu0
  %568 = vmatprep.mubr.f32.mxu0 0.0
  %569 = vmatmul.mubr.f32.gmra.mxu0 %v241
  %v570 = vpop.f32.mrf.mxu0
  %v571 = vadd.f32 %v482, %v570
  %v572 = vpop.f32.mrf.mxu0
  %573 = vmatprep.mubr.f32.mxu0 0.0
  %574 = vmatmul.mubr.f32.gmra.mxu0 %v244
  %v575 = vpop.f32.mrf.mxu0
  %v576 = vadd.f32 %v482, %v575
  %v577 = vpop.f32.mrf.mxu0
  %578 = vmatprep.mubr.f32.mxu0 0.0
  %579 = vmatmul.mubr.f32.gmra.mxu0 %v247
  %v580 = vpop.f32.mrf.mxu0
  %v581 = vadd.f32 %v482, %v580
  %v582 = vpop.f32.mrf.mxu0
  %583 = vmatprep.mubr.f32.mxu0 0.0
  %584 = vmatmul.mubr.f32.gmra.mxu0 %v250
  %v585 = vpop.f32.mrf.mxu0
  %v586 = vadd.f32 %v482, %v585
  %v587 = vpop.f32.mrf.mxu0
  %588 = vdwg.mxu0
  %v589 = vld [vmem:[%s3] sm:$0xff]
  %v590 = vld [vmem:[%s3 + $0x8] sm:$0xff]
  %v591 = vld [vmem:[%s3 + $0x10] sm:$0xff]
  %v592 = vld [vmem:[%s3 + $0x18] sm:$0xff]
  %s593 = scalar_lea.vmem %s3, 32
  %v594 = vld [vmem:[%s593] sm:$0xff]
  %v595 = vld [vmem:[%s593 + $0x8] sm:$0xff]
  %v596 = vld [vmem:[%s593 + $0x10] sm:$0xff]
  %v597 = vld [vmem:[%s593 + $0x18] sm:$0xff]
  %s598 = scalar_lea.vmem %s3, 64
  %v599 = vld [vmem:[%s598] sm:$0xff]
  %v600 = vld [vmem:[%s598 + $0x8] sm:$0xff]
  %v601 = vld [vmem:[%s598 + $0x10] sm:$0xff]
  %v602 = vld [vmem:[%s598 + $0x18] sm:$0xff]
  %v603 = vld [vmem:[%s5] sm:$0x1]
  %s604 = scalar_lea.vmem %s5, 1
  %v605 = vld [vmem:[%s604] sm:$0x1]
  %s606 = scalar_lea.vmem %s5, 2
  %v607 = vld [vmem:[%s606] sm:$0x1]
  %v609 = vlaneseq
  %v610 = vshrl.u32 %v609, 7
  %v611 = vsub.s32 0, %v610
  %v612 = vrot.slane %v603, %v611
  %vm614 = vcmask 261120
  %v616 = vsel %vm614, 0.0, 0
  %618 = vmatprep.subr.mxu0 0.0
  %619 = vmatpush1.msra.mxu0 0.0
  %620 = vmatprep.subr.mxu0 0.0
  %621 = vmatpush1.msra.mxu0 0.0
  %622 = vmatprep.subr.mxu0 0.0
  %623 = vmatpush1.msra.mxu0 0.0
  %624 = vmatprep.subr.mxu0 0.0
  %625 = vmatpush1.msra.mxu0 0.0
  %626 = vmatprep.subr.mxu0 0.0
  %627 = vmatpush1.msra.mxu0 0.0
  %628 = vmatprep.subr.mxu0 0.0
  %629 = vmatpush1.msra.mxu0 0.0
  %630 = vmatprep.subr.mxu0 0.0
  %631 = vmatpush1.msra.mxu0 0.0
  %632 = vmatprep.subr.mxu0 0.0
  %633 = vmatpush1.msra.mxu0 0.0
  %634 = vmatprep.subr.mxu0 0.0
  %635 = vmatpush1.msra.mxu0 0.0
  %636 = vmatprep.subr.mxu0 0.0
  %637 = vmatpush1.msra.mxu0 0.0
  %638 = vmatprep.subr.mxu0 0.0
  %639 = vmatpush1.msra.mxu0 0.0
  %640 = vmatprep.subr.mxu0 0.0
  %641 = vmatpush1.msra.mxu0 0.0
  %642 = vmatprep.subr.mxu0 0.0
  %643 = vmatpush1.msra.mxu0 %v592
  %644 = vmatprep.subr.mxu0 0.0
  %645 = vmatpush1.msra.mxu0 %v591
  %646 = vmatprep.subr.mxu0 0.0
  %647 = vmatpush1.msra.mxu0 %v590
  %648 = vmatprep.subr.mxu0 0.0
  %649 = vmatpush1.msra.mxu0 %v589
  %650 = vmatprep.subr.mxu0 0.0
  %651 = vmatpush2.msra.mxu0 0.0
  %652 = vmatprep.subr.mxu0 0.0
  %653 = vmatpush2.msra.mxu0 0.0
  %654 = vmatprep.subr.mxu0 0.0
  %655 = vmatpush2.msra.mxu0 0.0
  %656 = vmatprep.subr.mxu0 0.0
  %657 = vmatpush2.msra.mxu0 0.0
  %658 = vmatprep.subr.mxu0 0.0
  %659 = vmatpush2.msra.mxu0 0.0
  %660 = vmatprep.subr.mxu0 0.0
  %661 = vmatpush2.msra.mxu0 0.0
  %662 = vmatprep.subr.mxu0 0.0
  %663 = vmatpush2.msra.mxu0 0.0
  %664 = vmatprep.subr.mxu0 0.0
  %665 = vmatpush2.msra.mxu0 0.0
  %666 = vmatprep.subr.mxu0 0.0
  %667 = vmatpush2.msra.mxu0 0.0
  %668 = vmatprep.subr.mxu0 0.0
  %669 = vmatpush2.msra.mxu0 0.0
  %670 = vmatprep.subr.mxu0 0.0
  %671 = vmatpush2.msra.mxu0 0.0
  %672 = vmatprep.subr.mxu0 0.0
  %673 = vmatpush2.msra.mxu0 0.0
  %674 = vmatprep.subr.mxu0 0.0
  %675 = vmatpush2.msra.mxu0 0.0
  %676 = vmatprep.subr.mxu0 0.0
  %677 = vmatpush2.msra.mxu0 0.0
  %678 = vmatprep.subr.mxu0 0.0
  %679 = vmatpush2.msra.mxu0 0.0
  %680 = vmatprep.subr.mxu0 0.0
  %681 = vmatpush2.msra.mxu0 0.0
  %682 = vmatprep.mubr.f32.mxu0 0.0
  %683 = vmatmul.mubr.f32.gmra.mxu0 %v616
  %v684 = vpop.f32.mrf.mxu0
  %v685 = vadd.f32 %v612, %v684
  %v686 = vpop.f32.mrf.mxu0
  %687 = vdwg.mxu0
  %v689 = vlaneseq
  %v690 = vshrl.u32 %v689, 7
  %v691 = vsub.s32 0, %v690
  %v692 = vrot.slane %v605, %v691
  %694 = vmatprep.subr.mxu0 0.0
  %695 = vmatpush1.msra.mxu0 0.0
  %696 = vmatprep.subr.mxu0 0.0
  %697 = vmatpush1.msra.mxu0 0.0
  %698 = vmatprep.subr.mxu0 0.0
  %699 = vmatpush1.msra.mxu0 0.0
  %700 = vmatprep.subr.mxu0 0.0
  %701 = vmatpush1.msra.mxu0 0.0
  %702 = vmatprep.subr.mxu0 0.0
  %703 = vmatpush1.msra.mxu0 0.0
  %704 = vmatprep.subr.mxu0 0.0
  %705 = vmatpush1.msra.mxu0 0.0
  %706 = vmatprep.subr.mxu0 0.0
  %707 = vmatpush1.msra.mxu0 0.0
  %708 = vmatprep.subr.mxu0 0.0
  %709 = vmatpush1.msra.mxu0 0.0
  %710 = vmatprep.subr.mxu0 0.0
  %711 = vmatpush1.msra.mxu0 0.0
  %712 = vmatprep.subr.mxu0 0.0
  %713 = vmatpush1.msra.mxu0 0.0
  %714 = vmatprep.subr.mxu0 0.0
  %715 = vmatpush1.msra.mxu0 0.0
  %716 = vmatprep.subr.mxu0 0.0
  %717 = vmatpush1.msra.mxu0 0.0
  %718 = vmatprep.subr.mxu0 0.0
  %719 = vmatpush1.msra.mxu0 %v597
  %720 = vmatprep.subr.mxu0 0.0
  %721 = vmatpush1.msra.mxu0 %v596
  %722 = vmatprep.subr.mxu0 0.0
  %723 = vmatpush1.msra.mxu0 %v595
  %724 = vmatprep.subr.mxu0 0.0
  %725 = vmatpush1.msra.mxu0 %v594
  %726 = vmatprep.subr.mxu0 0.0
  %727 = vmatpush2.msra.mxu0 0.0
  %728 = vmatprep.subr.mxu0 0.0
  %729 = vmatpush2.msra.mxu0 0.0
  %730 = vmatprep.subr.mxu0 0.0
  %731 = vmatpush2.msra.mxu0 0.0
  %732 = vmatprep.subr.mxu0 0.0
  %733 = vmatpush2.msra.mxu0 0.0
  %734 = vmatprep.subr.mxu0 0.0
  %735 = vmatpush2.msra.mxu0 0.0
  %736 = vmatprep.subr.mxu0 0.0
  %737 = vmatpush2.msra.mxu0 0.0
  %738 = vmatprep.subr.mxu0 0.0
  %739 = vmatpush2.msra.mxu0 0.0
  %740 = vmatprep.subr.mxu0 0.0
  %741 = vmatpush2.msra.mxu0 0.0
  %742 = vmatprep.subr.mxu0 0.0
  %743 = vmatpush2.msra.mxu0 0.0
  %744 = vmatprep.subr.mxu0 0.0
  %745 = vmatpush2.msra.mxu0 0.0
  %746 = vmatprep.subr.mxu0 0.0
  %747 = vmatpush2.msra.mxu0 0.0
  %748 = vmatprep.subr.mxu0 0.0
  %749 = vmatpush2.msra.mxu0 0.0
  %750 = vmatprep.subr.mxu0 0.0
  %751 = vmatpush2.msra.mxu0 0.0
  %752 = vmatprep.subr.mxu0 0.0
  %753 = vmatpush2.msra.mxu0 0.0
  %754 = vmatprep.subr.mxu0 0.0
  %755 = vmatpush2.msra.mxu0 0.0
  %756 = vmatprep.subr.mxu0 0.0
  %757 = vmatpush2.msra.mxu0 0.0
  %758 = vmatprep.mubr.f32.mxu0 0.0
  %759 = vmatmul.mubr.f32.gmra.mxu0 %v616
  %v760 = vpop.f32.mrf.mxu0
  %v761 = vadd.f32 %v692, %v760
  %v762 = vpop.f32.mrf.mxu0
  %763 = vdwg.mxu0
  %v765 = vlaneseq
  %v766 = vshrl.u32 %v765, 7
  %v767 = vsub.s32 0, %v766
  %v768 = vrot.slane %v607, %v767
  %770 = vmatprep.subr.mxu0 0.0
  %771 = vmatpush1.msra.mxu0 0.0
  %772 = vmatprep.subr.mxu0 0.0
  %773 = vmatpush1.msra.mxu0 0.0
  %774 = vmatprep.subr.mxu0 0.0
  %775 = vmatpush1.msra.mxu0 0.0
  %776 = vmatprep.subr.mxu0 0.0
  %777 = vmatpush1.msra.mxu0 0.0
  %778 = vmatprep.subr.mxu0 0.0
  %779 = vmatpush1.msra.mxu0 0.0
  %780 = vmatprep.subr.mxu0 0.0
  %781 = vmatpush1.msra.mxu0 0.0
  %782 = vmatprep.subr.mxu0 0.0
  %783 = vmatpush1.msra.mxu0 0.0
  %784 = vmatprep.subr.mxu0 0.0
  %785 = vmatpush1.msra.mxu0 0.0
  %786 = vmatprep.subr.mxu0 0.0
  %787 = vmatpush1.msra.mxu0 0.0
  %788 = vmatprep.subr.mxu0 0.0
  %789 = vmatpush1.msra.mxu0 0.0
  %790 = vmatprep.subr.mxu0 0.0
  %791 = vmatpush1.msra.mxu0 0.0
  %792 = vmatprep.subr.mxu0 0.0
  %793 = vmatpush1.msra.mxu0 0.0
  %794 = vmatprep.subr.mxu0 0.0
  %795 = vmatpush1.msra.mxu0 %v602
  %796 = vmatprep.subr.mxu0 0.0
  %797 = vmatpush1.msra.mxu0 %v601
  %798 = vmatprep.subr.mxu0 0.0
  %799 = vmatpush1.msra.mxu0 %v600
  %800 = vmatprep.subr.mxu0 0.0
  %801 = vmatpush1.msra.mxu0 %v599
  %802 = vmatprep.subr.mxu0 0.0
  %803 = vmatpush2.msra.mxu0 0.0
  %804 = vmatprep.subr.mxu0 0.0
  %805 = vmatpush2.msra.mxu0 0.0
  %806 = vmatprep.subr.mxu0 0.0
  %807 = vmatpush2.msra.mxu0 0.0
  %808 = vmatprep.subr.mxu0 0.0
  %809 = vmatpush2.msra.mxu0 0.0
  %810 = vmatprep.subr.mxu0 0.0
  %811 = vmatpush2.msra.mxu0 0.0
  %812 = vmatprep.subr.mxu0 0.0
  %813 = vmatpush2.msra.mxu0 0.0
  %814 = vmatprep.subr.mxu0 0.0
  %815 = vmatpush2.msra.mxu0 0.0
  %816 = vmatprep.subr.mxu0 0.0
  %817 = vmatpush2.msra.mxu0 0.0
  %818 = vmatprep.subr.mxu0 0.0
  %819 = vmatpush2.msra.mxu0 0.0
  %820 = vmatprep.subr.mxu0 0.0
  %821 = vmatpush2.msra.mxu0 0.0
  %822 = vmatprep.subr.mxu0 0.0
  %823 = vmatpush2.msra.mxu0 0.0
  %824 = vmatprep.subr.mxu0 0.0
  %825 = vmatpush2.msra.mxu0 0.0
  %826 = vmatprep.subr.mxu0 0.0
  %827 = vmatpush2.msra.mxu0 0.0
  %828 = vmatprep.subr.mxu0 0.0
  %829 = vmatpush2.msra.mxu0 0.0
  %830 = vmatprep.subr.mxu0 0.0
  %831 = vmatpush2.msra.mxu0 0.0
  %832 = vmatprep.subr.mxu0 0.0
  %833 = vmatpush2.msra.mxu0 0.0
  %834 = vmatprep.mubr.f32.mxu0 0.0
  %835 = vmatmul.mubr.f32.gmra.mxu0 %v616
  %v836 = vpop.f32.mrf.mxu0
  %v837 = vadd.f32 %v768, %v836
  %v838 = vpop.f32.mrf.mxu0
  %839 = vdwg.mxu0
  %v840 = vadd.f32 %v319, %v685
  %v841 = vxor.u32 %v840, 2147483648
  %v842 = vmul.f32 %v841, 1.442695
  %v843 = vpow.pop %v842
  %v844 = vadd.f32 %v843, 1.0
  %v845 = vrcp.pop %v844
  %v846 = vmul.f32 1.0, %v845
  %v847 = vadd.f32 %v435, %v761
  %v848 = vxor.u32 %v847, 2147483648
  %v849 = vmul.f32 %v848, 1.442695
  %v850 = vpow.pop %v849
  %v851 = vadd.f32 %v850, 1.0
  %v852 = vrcp.pop %v851
  %v853 = vmul.f32 1.0, %v852
  %v854 = vmul.f32 %v846, %v837
  %v855 = vadd.f32 %v551, %v854
  %v856 = vtanh.pop %v855
  %v857 = vsub.f32 1.0, %v853
  %v858 = vmul.f32 %v857, %v856
  %v859 = vmul.f32 %v853, 0.0
  %v860 = vadd.f32 %v858, %v859
  %v862 = vsel %vm614, %v860, 0
  %864 = vmatprep.subr.mxu0 0.0
  %865 = vmatpush1.msra.mxu0 0.0
  %866 = vmatprep.subr.mxu0 0.0
  %867 = vmatpush1.msra.mxu0 0.0
  %868 = vmatprep.subr.mxu0 0.0
  %869 = vmatpush1.msra.mxu0 0.0
  %870 = vmatprep.subr.mxu0 0.0
  %871 = vmatpush1.msra.mxu0 0.0
  %872 = vmatprep.subr.mxu0 0.0
  %873 = vmatpush1.msra.mxu0 0.0
  %874 = vmatprep.subr.mxu0 0.0
  %875 = vmatpush1.msra.mxu0 0.0
  %876 = vmatprep.subr.mxu0 0.0
  %877 = vmatpush1.msra.mxu0 0.0
  %878 = vmatprep.subr.mxu0 0.0
  %879 = vmatpush1.msra.mxu0 0.0
  %880 = vmatprep.subr.mxu0 0.0
  %881 = vmatpush1.msra.mxu0 0.0
  %882 = vmatprep.subr.mxu0 0.0
  %883 = vmatpush1.msra.mxu0 0.0
  %884 = vmatprep.subr.mxu0 0.0
  %885 = vmatpush1.msra.mxu0 0.0
  %886 = vmatprep.subr.mxu0 0.0
  %887 = vmatpush1.msra.mxu0 0.0
  %888 = vmatprep.subr.mxu0 0.0
  %889 = vmatpush1.msra.mxu0 %v592
  %890 = vmatprep.subr.mxu0 0.0
  %891 = vmatpush1.msra.mxu0 %v591
  %892 = vmatprep.subr.mxu0 0.0
  %893 = vmatpush1.msra.mxu0 %v590
  %894 = vmatprep.subr.mxu0 0.0
  %895 = vmatpush1.msra.mxu0 %v589
  %896 = vmatprep.subr.mxu0 0.0
  %897 = vmatpush2.msra.mxu0 0.0
  %898 = vmatprep.subr.mxu0 0.0
  %899 = vmatpush2.msra.mxu0 0.0
  %900 = vmatprep.subr.mxu0 0.0
  %901 = vmatpush2.msra.mxu0 0.0
  %902 = vmatprep.subr.mxu0 0.0
  %903 = vmatpush2.msra.mxu0 0.0
  %904 = vmatprep.subr.mxu0 0.0
  %905 = vmatpush2.msra.mxu0 0.0
  %906 = vmatprep.subr.mxu0 0.0
  %907 = vmatpush2.msra.mxu0 0.0
  %908 = vmatprep.subr.mxu0 0.0
  %909 = vmatpush2.msra.mxu0 0.0
  %910 = vmatprep.subr.mxu0 0.0
  %911 = vmatpush2.msra.mxu0 0.0
  %912 = vmatprep.subr.mxu0 0.0
  %913 = vmatpush2.msra.mxu0 0.0
  %914 = vmatprep.subr.mxu0 0.0
  %915 = vmatpush2.msra.mxu0 0.0
  %916 = vmatprep.subr.mxu0 0.0
  %917 = vmatpush2.msra.mxu0 0.0
  %918 = vmatprep.subr.mxu0 0.0
  %919 = vmatpush2.msra.mxu0 0.0
  %920 = vmatprep.subr.mxu0 0.0
  %921 = vmatpush2.msra.mxu0 0.0
  %922 = vmatprep.subr.mxu0 0.0
  %923 = vmatpush2.msra.mxu0 0.0
  %924 = vmatprep.subr.mxu0 0.0
  %925 = vmatpush2.msra.mxu0 0.0
  %926 = vmatprep.subr.mxu0 0.0
  %927 = vmatpush2.msra.mxu0 0.0
  %928 = vmatprep.mubr.f32.mxu0 0.0
  %929 = vmatmul.mubr.f32.gmra.mxu0 %v862
  %v930 = vpop.f32.mrf.mxu0
  %v931 = vadd.f32 %v612, %v930
  %v932 = vpop.f32.mrf.mxu0
  %933 = vdwg.mxu0
  %934 = vmatprep.subr.mxu0 0.0
  %935 = vmatpush1.msra.mxu0 0.0
  %936 = vmatprep.subr.mxu0 0.0
  %937 = vmatpush1.msra.mxu0 0.0
  %938 = vmatprep.subr.mxu0 0.0
  %939 = vmatpush1.msra.mxu0 0.0
  %940 = vmatprep.subr.mxu0 0.0
  %941 = vmatpush1.msra.mxu0 0.0
  %942 = vmatprep.subr.mxu0 0.0
  %943 = vmatpush1.msra.mxu0 0.0
  %944 = vmatprep.subr.mxu0 0.0
  %945 = vmatpush1.msra.mxu0 0.0
  %946 = vmatprep.subr.mxu0 0.0
  %947 = vmatpush1.msra.mxu0 0.0
  %948 = vmatprep.subr.mxu0 0.0
  %949 = vmatpush1.msra.mxu0 0.0
  %950 = vmatprep.subr.mxu0 0.0
  %951 = vmatpush1.msra.mxu0 0.0
  %952 = vmatprep.subr.mxu0 0.0
  %953 = vmatpush1.msra.mxu0 0.0
  %954 = vmatprep.subr.mxu0 0.0
  %955 = vmatpush1.msra.mxu0 0.0
  %956 = vmatprep.subr.mxu0 0.0
  %957 = vmatpush1.msra.mxu0 0.0
  %958 = vmatprep.subr.mxu0 0.0
  %959 = vmatpush1.msra.mxu0 %v597
  %960 = vmatprep.subr.mxu0 0.0
  %961 = vmatpush1.msra.mxu0 %v596
  %962 = vmatprep.subr.mxu0 0.0
  %963 = vmatpush1.msra.mxu0 %v595
  %964 = vmatprep.subr.mxu0 0.0
  %965 = vmatpush1.msra.mxu0 %v594
  %966 = vmatprep.subr.mxu0 0.0
  %967 = vmatpush2.msra.mxu0 0.0
  %968 = vmatprep.subr.mxu0 0.0
  %969 = vmatpush2.msra.mxu0 0.0
  %970 = vmatprep.subr.mxu0 0.0
  %971 = vmatpush2.msra.mxu0 0.0
  %972 = vmatprep.subr.mxu0 0.0
  %973 = vmatpush2.msra.mxu0 0.0
  %974 = vmatprep.subr.mxu0 0.0
  %975 = vmatpush2.msra.mxu0 0.0
  %976 = vmatprep.subr.mxu0 0.0
  %977 = vmatpush2.msra.mxu0 0.0
  %978 = vmatprep.subr.mxu0 0.0
  %979 = vmatpush2.msra.mxu0 0.0
  %980 = vmatprep.subr.mxu0 0.0
  %981 = vmatpush2.msra.mxu0 0.0
  %982 = vmatprep.subr.mxu0 0.0
  %983 = vmatpush2.msra.mxu0 0.0
  %984 = vmatprep.subr.mxu0 0.0
  %985 = vmatpush2.msra.mxu0 0.0
  %986 = vmatprep.subr.mxu0 0.0
  %987 = vmatpush2.msra.mxu0 0.0
  %988 = vmatprep.subr.mxu0 0.0
  %989 = vmatpush2.msra.mxu0 0.0
  %990 = vmatprep.subr.mxu0 0.0
  %991 = vmatpush2.msra.mxu0 0.0
  %992 = vmatprep.subr.mxu0 0.0
  %993 = vmatpush2.msra.mxu0 0.0
  %994 = vmatprep.subr.mxu0 0.0
  %995 = vmatpush2.msra.mxu0 0.0
  %996 = vmatprep.subr.mxu0 0.0
  %997 = vmatpush2.msra.mxu0 0.0
  %998 = vmatprep.mubr.f32.mxu0 0.0
  %999 = vmatmul.mubr.f32.gmra.mxu0 %v862
  %v1000 = vpop.f32.mrf.mxu0
  %v1001 = vadd.f32 %v692, %v1000
  %v1002 = vpop.f32.mrf.mxu0
  %1003 = vdwg.mxu0
  %1004 = vmatprep.subr.mxu0 0.0
  %1005 = vmatpush1.msra.mxu0 0.0
  %1006 = vmatprep.subr.mxu0 0.0
  %1007 = vmatpush1.msra.mxu0 0.0
  %1008 = vmatprep.subr.mxu0 0.0
  %1009 = vmatpush1.msra.mxu0 0.0
  %1010 = vmatprep.subr.mxu0 0.0
  %1011 = vmatpush1.msra.mxu0 0.0
  %1012 = vmatprep.subr.mxu0 0.0
  %1013 = vmatpush1.msra.mxu0 0.0
  %1014 = vmatprep.subr.mxu0 0.0
  %1015 = vmatpush1.msra.mxu0 0.0
  %1016 = vmatprep.subr.mxu0 0.0
  %1017 = vmatpush1.msra.mxu0 0.0
  %1018 = vmatprep.subr.mxu0 0.0
  %1019 = vmatpush1.msra.mxu0 0.0
  %1020 = vmatprep.subr.mxu0 0.0
  %1021 = vmatpush1.msra.mxu0 0.0
  %1022 = vmatprep.subr.mxu0 0.0
  %1023 = vmatpush1.msra.mxu0 0.0
  %1024 = vmatprep.subr.mxu0 0.0
  %1025 = vmatpush1.msra.mxu0 0.0
  %1026 = vmatprep.subr.mxu0 0.0
  %1027 = vmatpush1.msra.mxu0 0.0
  %1028 = vmatprep.subr.mxu0 0.0
  %1029 = vmatpush1.msra.mxu0 %v602
  %1030 = vmatprep.subr.mxu0 0.0
  %1031 = vmatpush1.msra.mxu0 %v601
  %1032 = vmatprep.subr.mxu0 0.0
  %1033 = vmatpush1.msra.mxu0 %v600
  %1034 = vmatprep.subr.mxu0 0.0
  %1035 = vmatpush1.msra.mxu0 %v599
  %1036 = vmatprep.subr.mxu0 0.0
  %1037 = vmatpush2.msra.mxu0 0.0
  %1038 = vmatprep.subr.mxu0 0.0
  %1039 = vmatpush2.msra.mxu0 0.0
  %1040 = vmatprep.subr.mxu0 0.0
  %1041 = vmatpush2.msra.mxu0 0.0
  %1042 = vmatprep.subr.mxu0 0.0
  %1043 = vmatpush2.msra.mxu0 0.0
  %1044 = vmatprep.subr.mxu0 0.0
  %1045 = vmatpush2.msra.mxu0 0.0
  %1046 = vmatprep.subr.mxu0 0.0
  %1047 = vmatpush2.msra.mxu0 0.0
  %1048 = vmatprep.subr.mxu0 0.0
  %1049 = vmatpush2.msra.mxu0 0.0
  %1050 = vmatprep.subr.mxu0 0.0
  %1051 = vmatpush2.msra.mxu0 0.0
  %1052 = vmatprep.subr.mxu0 0.0
  %1053 = vmatpush2.msra.mxu0 0.0
  %1054 = vmatprep.subr.mxu0 0.0
  %1055 = vmatpush2.msra.mxu0 0.0
  %1056 = vmatprep.subr.mxu0 0.0
  %1057 = vmatpush2.msra.mxu0 0.0
  %1058 = vmatprep.subr.mxu0 0.0
  %1059 = vmatpush2.msra.mxu0 0.0
  %1060 = vmatprep.subr.mxu0 0.0
  %1061 = vmatpush2.msra.mxu0 0.0
  %1062 = vmatprep.subr.mxu0 0.0
  %1063 = vmatpush2.msra.mxu0 0.0
  %1064 = vmatprep.subr.mxu0 0.0
  %1065 = vmatpush2.msra.mxu0 0.0
  %1066 = vmatprep.subr.mxu0 0.0
  %1067 = vmatpush2.msra.mxu0 0.0
  %1068 = vmatprep.mubr.f32.mxu0 0.0
  %1069 = vmatmul.mubr.f32.gmra.mxu0 %v862
  %v1070 = vpop.f32.mrf.mxu0
  %v1071 = vadd.f32 %v768, %v1070
  %v1072 = vpop.f32.mrf.mxu0
  %1073 = vdwg.mxu0
  %v1074 = vadd.f32 %v324, %v931
  %v1075 = vxor.u32 %v1074, 2147483648
  %v1076 = vmul.f32 %v1075, 1.442695
  %v1077 = vpow.pop %v1076
  %v1078 = vadd.f32 %v1077, 1.0
  %v1079 = vrcp.pop %v1078
  %v1080 = vmul.f32 1.0, %v1079
  %v1081 = vadd.f32 %v440, %v1001
  %v1082 = vxor.u32 %v1081, 2147483648
  %v1083 = vmul.f32 %v1082, 1.442695
  %v1084 = vpow.pop %v1083
  %v1085 = vadd.f32 %v1084, 1.0
  %v1086 = vrcp.pop %v1085
  %v1087 = vmul.f32 1.0, %v1086
  %v1088 = vmul.f32 %v1080, %v1071
  %v1089 = vadd.f32 %v556, %v1088
  %v1090 = vtanh.pop %v1089
  %v1091 = vsub.f32 1.0, %v1087
  %v1092 = vmul.f32 %v1091, %v1090
  %v1093 = vmul.f32 %v1087, %v860
  %v1094 = vadd.f32 %v1092, %v1093
  %v1096 = vsel %vm614, %v1094, 0
  %1098 = vmatprep.subr.mxu0 0.0
  %1099 = vmatpush1.msra.mxu0 0.0
  %1100 = vmatprep.subr.mxu0 0.0
  %1101 = vmatpush1.msra.mxu0 0.0
  %1102 = vmatprep.subr.mxu0 0.0
  %1103 = vmatpush1.msra.mxu0 0.0
  %1104 = vmatprep.subr.mxu0 0.0
  %1105 = vmatpush1.msra.mxu0 0.0
  %1106 = vmatprep.subr.mxu0 0.0
  %1107 = vmatpush1.msra.mxu0 0.0
  %1108 = vmatprep.subr.mxu0 0.0
  %1109 = vmatpush1.msra.mxu0 0.0
  %1110 = vmatprep.subr.mxu0 0.0
  %1111 = vmatpush1.msra.mxu0 0.0
  %1112 = vmatprep.subr.mxu0 0.0
  %1113 = vmatpush1.msra.mxu0 0.0
  %1114 = vmatprep.subr.mxu0 0.0
  %1115 = vmatpush1.msra.mxu0 0.0
  %1116 = vmatprep.subr.mxu0 0.0
  %1117 = vmatpush1.msra.mxu0 0.0
  %1118 = vmatprep.subr.mxu0 0.0
  %1119 = vmatpush1.msra.mxu0 0.0
  %1120 = vmatprep.subr.mxu0 0.0
  %1121 = vmatpush1.msra.mxu0 0.0
  %1122 = vmatprep.subr.mxu0 0.0
  %1123 = vmatpush1.msra.mxu0 %v592
  %1124 = vmatprep.subr.mxu0 0.0
  %1125 = vmatpush1.msra.mxu0 %v591
  %1126 = vmatprep.subr.mxu0 0.0
  %1127 = vmatpush1.msra.mxu0 %v590
  %1128 = vmatprep.subr.mxu0 0.0
  %1129 = vmatpush1.msra.mxu0 %v589
  %1130 = vmatprep.subr.mxu0 0.0
  %1131 = vmatpush2.msra.mxu0 0.0
  %1132 = vmatprep.subr.mxu0 0.0
  %1133 = vmatpush2.msra.mxu0 0.0
  %1134 = vmatprep.subr.mxu0 0.0
  %1135 = vmatpush2.msra.mxu0 0.0
  %1136 = vmatprep.subr.mxu0 0.0
  %1137 = vmatpush2.msra.mxu0 0.0
  %1138 = vmatprep.subr.mxu0 0.0
  %1139 = vmatpush2.msra.mxu0 0.0
  %1140 = vmatprep.subr.mxu0 0.0
  %1141 = vmatpush2.msra.mxu0 0.0
  %1142 = vmatprep.subr.mxu0 0.0
  %1143 = vmatpush2.msra.mxu0 0.0
  %1144 = vmatprep.subr.mxu0 0.0
  %1145 = vmatpush2.msra.mxu0 0.0
  %1146 = vmatprep.subr.mxu0 0.0
  %1147 = vmatpush2.msra.mxu0 0.0
  %1148 = vmatprep.subr.mxu0 0.0
  %1149 = vmatpush2.msra.mxu0 0.0
  %1150 = vmatprep.subr.mxu0 0.0
  %1151 = vmatpush2.msra.mxu0 0.0
  %1152 = vmatprep.subr.mxu0 0.0
  %1153 = vmatpush2.msra.mxu0 0.0
  %1154 = vmatprep.subr.mxu0 0.0
  %1155 = vmatpush2.msra.mxu0 0.0
  %1156 = vmatprep.subr.mxu0 0.0
  %1157 = vmatpush2.msra.mxu0 0.0
  %1158 = vmatprep.subr.mxu0 0.0
  %1159 = vmatpush2.msra.mxu0 0.0
  %1160 = vmatprep.subr.mxu0 0.0
  %1161 = vmatpush2.msra.mxu0 0.0
  %1162 = vmatprep.mubr.f32.mxu0 0.0
  %1163 = vmatmul.mubr.f32.gmra.mxu0 %v1096
  %v1164 = vpop.f32.mrf.mxu0
  %v1165 = vadd.f32 %v612, %v1164
  %v1166 = vpop.f32.mrf.mxu0
  %1167 = vdwg.mxu0
  %1168 = vmatprep.subr.mxu0 0.0
  %1169 = vmatpush1.msra.mxu0 0.0
  %1170 = vmatprep.subr.mxu0 0.0
  %1171 = vmatpush1.msra.mxu0 0.0
  %1172 = vmatprep.subr.mxu0 0.0
  %1173 = vmatpush1.msra.mxu0 0.0
  %1174 = vmatprep.subr.mxu0 0.0
  %1175 = vmatpush1.msra.mxu0 0.0
  %1176 = vmatprep.subr.mxu0 0.0
  %1177 = vmatpush1.msra.mxu0 0.0
  %1178 = vmatprep.subr.mxu0 0.0
  %1179 = vmatpush1.msra.mxu0 0.0
  %1180 = vmatprep.subr.mxu0 0.0
  %1181 = vmatpush1.msra.mxu0 0.0
  %1182 = vmatprep.subr.mxu0 0.0
  %1183 = vmatpush1.msra.mxu0 0.0
  %1184 = vmatprep.subr.mxu0 0.0
  %1185 = vmatpush1.msra.mxu0 0.0
  %1186 = vmatprep.subr.mxu0 0.0
  %1187 = vmatpush1.msra.mxu0 0.0
  %1188 = vmatprep.subr.mxu0 0.0
  %1189 = vmatpush1.msra.mxu0 0.0
  %1190 = vmatprep.subr.mxu0 0.0
  %1191 = vmatpush1.msra.mxu0 0.0
  %1192 = vmatprep.subr.mxu0 0.0
  %1193 = vmatpush1.msra.mxu0 %v597
  %1194 = vmatprep.subr.mxu0 0.0
  %1195 = vmatpush1.msra.mxu0 %v596
  %1196 = vmatprep.subr.mxu0 0.0
  %1197 = vmatpush1.msra.mxu0 %v595
  %1198 = vmatprep.subr.mxu0 0.0
  %1199 = vmatpush1.msra.mxu0 %v594
  %1200 = vmatprep.subr.mxu0 0.0
  %1201 = vmatpush2.msra.mxu0 0.0
  %1202 = vmatprep.subr.mxu0 0.0
  %1203 = vmatpush2.msra.mxu0 0.0
  %1204 = vmatprep.subr.mxu0 0.0
  %1205 = vmatpush2.msra.mxu0 0.0
  %1206 = vmatprep.subr.mxu0 0.0
  %1207 = vmatpush2.msra.mxu0 0.0
  %1208 = vmatprep.subr.mxu0 0.0
  %1209 = vmatpush2.msra.mxu0 0.0
  %1210 = vmatprep.subr.mxu0 0.0
  %1211 = vmatpush2.msra.mxu0 0.0
  %1212 = vmatprep.subr.mxu0 0.0
  %1213 = vmatpush2.msra.mxu0 0.0
  %1214 = vmatprep.subr.mxu0 0.0
  %1215 = vmatpush2.msra.mxu0 0.0
  %1216 = vmatprep.subr.mxu0 0.0
  %1217 = vmatpush2.msra.mxu0 0.0
  %1218 = vmatprep.subr.mxu0 0.0
  %1219 = vmatpush2.msra.mxu0 0.0
  %1220 = vmatprep.subr.mxu0 0.0
  %1221 = vmatpush2.msra.mxu0 0.0
  %1222 = vmatprep.subr.mxu0 0.0
  %1223 = vmatpush2.msra.mxu0 0.0
  %1224 = vmatprep.subr.mxu0 0.0
  %1225 = vmatpush2.msra.mxu0 0.0
  %1226 = vmatprep.subr.mxu0 0.0
  %1227 = vmatpush2.msra.mxu0 0.0
  %1228 = vmatprep.subr.mxu0 0.0
  %1229 = vmatpush2.msra.mxu0 0.0
  %1230 = vmatprep.subr.mxu0 0.0
  %1231 = vmatpush2.msra.mxu0 0.0
  %1232 = vmatprep.mubr.f32.mxu0 0.0
  %1233 = vmatmul.mubr.f32.gmra.mxu0 %v1096
  %v1234 = vpop.f32.mrf.mxu0
  %v1235 = vadd.f32 %v692, %v1234
  %v1236 = vpop.f32.mrf.mxu0
  %1237 = vdwg.mxu0
  %1238 = vmatprep.subr.mxu0 0.0
  %1239 = vmatpush1.msra.mxu0 0.0
  %1240 = vmatprep.subr.mxu0 0.0
  %1241 = vmatpush1.msra.mxu0 0.0
  %1242 = vmatprep.subr.mxu0 0.0
  %1243 = vmatpush1.msra.mxu0 0.0
  %1244 = vmatprep.subr.mxu0 0.0
  %1245 = vmatpush1.msra.mxu0 0.0
  %1246 = vmatprep.subr.mxu0 0.0
  %1247 = vmatpush1.msra.mxu0 0.0
  %1248 = vmatprep.subr.mxu0 0.0
  %1249 = vmatpush1.msra.mxu0 0.0
  %1250 = vmatprep.subr.mxu0 0.0
  %1251 = vmatpush1.msra.mxu0 0.0
  %1252 = vmatprep.subr.mxu0 0.0
  %1253 = vmatpush1.msra.mxu0 0.0
  %1254 = vmatprep.subr.mxu0 0.0
  %1255 = vmatpush1.msra.mxu0 0.0
  %1256 = vmatprep.subr.mxu0 0.0
  %1257 = vmatpush1.msra.mxu0 0.0
  %1258 = vmatprep.subr.mxu0 0.0
  %1259 = vmatpush1.msra.mxu0 0.0
  %1260 = vmatprep.subr.mxu0 0.0
  %1261 = vmatpush1.msra.mxu0 0.0
  %1262 = vmatprep.subr.mxu0 0.0
  %1263 = vmatpush1.msra.mxu0 %v602
  %1264 = vmatprep.subr.mxu0 0.0
  %1265 = vmatpush1.msra.mxu0 %v601
  %1266 = vmatprep.subr.mxu0 0.0
  %1267 = vmatpush1.msra.mxu0 %v600
  %1268 = vmatprep.subr.mxu0 0.0
  %1269 = vmatpush1.msra.mxu0 %v599
  %1270 = vmatprep.subr.mxu0 0.0
  %1271 = vmatpush2.msra.mxu0 0.0
  %1272 = vmatprep.subr.mxu0 0.0
  %1273 = vmatpush2.msra.mxu0 0.0
  %1274 = vmatprep.subr.mxu0 0.0
  %1275 = vmatpush2.msra.mxu0 0.0
  %1276 = vmatprep.subr.mxu0 0.0
  %1277 = vmatpush2.msra.mxu0 0.0
  %1278 = vmatprep.subr.mxu0 0.0
  %1279 = vmatpush2.msra.mxu0 0.0
  %1280 = vmatprep.subr.mxu0 0.0
  %1281 = vmatpush2.msra.mxu0 0.0
  %1282 = vmatprep.subr.mxu0 0.0
  %1283 = vmatpush2.msra.mxu0 0.0
  %1284 = vmatprep.subr.mxu0 0.0
  %1285 = vmatpush2.msra.mxu0 0.0
  %1286 = vmatprep.subr.mxu0 0.0
  %1287 = vmatpush2.msra.mxu0 0.0
  %1288 = vmatprep.subr.mxu0 0.0
  %1289 = vmatpush2.msra.mxu0 0.0
  %1290 = vmatprep.subr.mxu0 0.0
  %1291 = vmatpush2.msra.mxu0 0.0
  %1292 = vmatprep.subr.mxu0 0.0
  %1293 = vmatpush2.msra.mxu0 0.0
  %1294 = vmatprep.subr.mxu0 0.0
  %1295 = vmatpush2.msra.mxu0 0.0
  %1296 = vmatprep.subr.mxu0 0.0
  %1297 = vmatpush2.msra.mxu0 0.0
  %1298 = vmatprep.subr.mxu0 0.0
  %1299 = vmatpush2.msra.mxu0 0.0
  %1300 = vmatprep.subr.mxu0 0.0
  %1301 = vmatpush2.msra.mxu0 0.0
  %1302 = vmatprep.mubr.f32.mxu0 0.0
  %1303 = vmatmul.mubr.f32.gmra.mxu0 %v1096
  %v1304 = vpop.f32.mrf.mxu0
  %v1305 = vadd.f32 %v768, %v1304
  %v1306 = vpop.f32.mrf.mxu0
  %1307 = vdwg.mxu0
  %v1308 = vadd.f32 %v329, %v1165
  %v1309 = vxor.u32 %v1308, 2147483648
  %v1310 = vmul.f32 %v1309, 1.442695
  %v1311 = vpow.pop %v1310
  %v1312 = vadd.f32 %v1311, 1.0
  %v1313 = vrcp.pop %v1312
  %v1314 = vmul.f32 1.0, %v1313
  %v1315 = vadd.f32 %v445, %v1235
  %v1316 = vxor.u32 %v1315, 2147483648
  %v1317 = vmul.f32 %v1316, 1.442695
  %v1318 = vpow.pop %v1317
  %v1319 = vadd.f32 %v1318, 1.0
  %v1320 = vrcp.pop %v1319
  %v1321 = vmul.f32 1.0, %v1320
  %v1322 = vmul.f32 %v1314, %v1305
  %v1323 = vadd.f32 %v561, %v1322
  %v1324 = vtanh.pop %v1323
  %v1325 = vsub.f32 1.0, %v1321
  %v1326 = vmul.f32 %v1325, %v1324
  %v1327 = vmul.f32 %v1321, %v1094
  %v1328 = vadd.f32 %v1326, %v1327
  %v1330 = vsel %vm614, %v1328, 0
  %1332 = vmatprep.subr.mxu0 0.0
  %1333 = vmatpush1.msra.mxu0 0.0
  %1334 = vmatprep.subr.mxu0 0.0
  %1335 = vmatpush1.msra.mxu0 0.0
  %1336 = vmatprep.subr.mxu0 0.0
  %1337 = vmatpush1.msra.mxu0 0.0
  %1338 = vmatprep.subr.mxu0 0.0
  %1339 = vmatpush1.msra.mxu0 0.0
  %1340 = vmatprep.subr.mxu0 0.0
  %1341 = vmatpush1.msra.mxu0 0.0
  %1342 = vmatprep.subr.mxu0 0.0
  %1343 = vmatpush1.msra.mxu0 0.0
  %1344 = vmatprep.subr.mxu0 0.0
  %1345 = vmatpush1.msra.mxu0 0.0
  %1346 = vmatprep.subr.mxu0 0.0
  %1347 = vmatpush1.msra.mxu0 0.0
  %1348 = vmatprep.subr.mxu0 0.0
  %1349 = vmatpush1.msra.mxu0 0.0
  %1350 = vmatprep.subr.mxu0 0.0
  %1351 = vmatpush1.msra.mxu0 0.0
  %1352 = vmatprep.subr.mxu0 0.0
  %1353 = vmatpush1.msra.mxu0 0.0
  %1354 = vmatprep.subr.mxu0 0.0
  %1355 = vmatpush1.msra.mxu0 0.0
  %1356 = vmatprep.subr.mxu0 0.0
  %1357 = vmatpush1.msra.mxu0 %v592
  %1358 = vmatprep.subr.mxu0 0.0
  %1359 = vmatpush1.msra.mxu0 %v591
  %1360 = vmatprep.subr.mxu0 0.0
  %1361 = vmatpush1.msra.mxu0 %v590
  %1362 = vmatprep.subr.mxu0 0.0
  %1363 = vmatpush1.msra.mxu0 %v589
  %1364 = vmatprep.subr.mxu0 0.0
  %1365 = vmatpush2.msra.mxu0 0.0
  %1366 = vmatprep.subr.mxu0 0.0
  %1367 = vmatpush2.msra.mxu0 0.0
  %1368 = vmatprep.subr.mxu0 0.0
  %1369 = vmatpush2.msra.mxu0 0.0
  %1370 = vmatprep.subr.mxu0 0.0
  %1371 = vmatpush2.msra.mxu0 0.0
  %1372 = vmatprep.subr.mxu0 0.0
  %1373 = vmatpush2.msra.mxu0 0.0
  %1374 = vmatprep.subr.mxu0 0.0
  %1375 = vmatpush2.msra.mxu0 0.0
  %1376 = vmatprep.subr.mxu0 0.0
  %1377 = vmatpush2.msra.mxu0 0.0
  %1378 = vmatprep.subr.mxu0 0.0
  %1379 = vmatpush2.msra.mxu0 0.0
  %1380 = vmatprep.subr.mxu0 0.0
  %1381 = vmatpush2.msra.mxu0 0.0
  %1382 = vmatprep.subr.mxu0 0.0
  %1383 = vmatpush2.msra.mxu0 0.0
  %1384 = vmatprep.subr.mxu0 0.0
  %1385 = vmatpush2.msra.mxu0 0.0
  %1386 = vmatprep.subr.mxu0 0.0
  %1387 = vmatpush2.msra.mxu0 0.0
  %1388 = vmatprep.subr.mxu0 0.0
  %1389 = vmatpush2.msra.mxu0 0.0
  %1390 = vmatprep.subr.mxu0 0.0
  %1391 = vmatpush2.msra.mxu0 0.0
  %1392 = vmatprep.subr.mxu0 0.0
  %1393 = vmatpush2.msra.mxu0 0.0
  %1394 = vmatprep.subr.mxu0 0.0
  %1395 = vmatpush2.msra.mxu0 0.0
  %1396 = vmatprep.mubr.f32.mxu0 0.0
  %1397 = vmatmul.mubr.f32.gmra.mxu0 %v1330
  %v1398 = vpop.f32.mrf.mxu0
  %v1399 = vadd.f32 %v612, %v1398
  %v1400 = vpop.f32.mrf.mxu0
  %1401 = vdwg.mxu0
  %1402 = vmatprep.subr.mxu0 0.0
  %1403 = vmatpush1.msra.mxu0 0.0
  %1404 = vmatprep.subr.mxu0 0.0
  %1405 = vmatpush1.msra.mxu0 0.0
  %1406 = vmatprep.subr.mxu0 0.0
  %1407 = vmatpush1.msra.mxu0 0.0
  %1408 = vmatprep.subr.mxu0 0.0
  %1409 = vmatpush1.msra.mxu0 0.0
  %1410 = vmatprep.subr.mxu0 0.0
  %1411 = vmatpush1.msra.mxu0 0.0
  %1412 = vmatprep.subr.mxu0 0.0
  %1413 = vmatpush1.msra.mxu0 0.0
  %1414 = vmatprep.subr.mxu0 0.0
  %1415 = vmatpush1.msra.mxu0 0.0
  %1416 = vmatprep.subr.mxu0 0.0
  %1417 = vmatpush1.msra.mxu0 0.0
  %1418 = vmatprep.subr.mxu0 0.0
  %1419 = vmatpush1.msra.mxu0 0.0
  %1420 = vmatprep.subr.mxu0 0.0
  %1421 = vmatpush1.msra.mxu0 0.0
  %1422 = vmatprep.subr.mxu0 0.0
  %1423 = vmatpush1.msra.mxu0 0.0
  %1424 = vmatprep.subr.mxu0 0.0
  %1425 = vmatpush1.msra.mxu0 0.0
  %1426 = vmatprep.subr.mxu0 0.0
  %1427 = vmatpush1.msra.mxu0 %v597
  %1428 = vmatprep.subr.mxu0 0.0
  %1429 = vmatpush1.msra.mxu0 %v596
  %1430 = vmatprep.subr.mxu0 0.0
  %1431 = vmatpush1.msra.mxu0 %v595
  %1432 = vmatprep.subr.mxu0 0.0
  %1433 = vmatpush1.msra.mxu0 %v594
  %1434 = vmatprep.subr.mxu0 0.0
  %1435 = vmatpush2.msra.mxu0 0.0
  %1436 = vmatprep.subr.mxu0 0.0
  %1437 = vmatpush2.msra.mxu0 0.0
  %1438 = vmatprep.subr.mxu0 0.0
  %1439 = vmatpush2.msra.mxu0 0.0
  %1440 = vmatprep.subr.mxu0 0.0
  %1441 = vmatpush2.msra.mxu0 0.0
  %1442 = vmatprep.subr.mxu0 0.0
  %1443 = vmatpush2.msra.mxu0 0.0
  %1444 = vmatprep.subr.mxu0 0.0
  %1445 = vmatpush2.msra.mxu0 0.0
  %1446 = vmatprep.subr.mxu0 0.0
  %1447 = vmatpush2.msra.mxu0 0.0
  %1448 = vmatprep.subr.mxu0 0.0
  %1449 = vmatpush2.msra.mxu0 0.0
  %1450 = vmatprep.subr.mxu0 0.0
  %1451 = vmatpush2.msra.mxu0 0.0
  %1452 = vmatprep.subr.mxu0 0.0
  %1453 = vmatpush2.msra.mxu0 0.0
  %1454 = vmatprep.subr.mxu0 0.0
  %1455 = vmatpush2.msra.mxu0 0.0
  %1456 = vmatprep.subr.mxu0 0.0
  %1457 = vmatpush2.msra.mxu0 0.0
  %1458 = vmatprep.subr.mxu0 0.0
  %1459 = vmatpush2.msra.mxu0 0.0
  %1460 = vmatprep.subr.mxu0 0.0
  %1461 = vmatpush2.msra.mxu0 0.0
  %1462 = vmatprep.subr.mxu0 0.0
  %1463 = vmatpush2.msra.mxu0 0.0
  %1464 = vmatprep.subr.mxu0 0.0
  %1465 = vmatpush2.msra.mxu0 0.0
  %1466 = vmatprep.mubr.f32.mxu0 0.0
  %1467 = vmatmul.mubr.f32.gmra.mxu0 %v1330
  %v1468 = vpop.f32.mrf.mxu0
  %v1469 = vadd.f32 %v692, %v1468
  %v1470 = vpop.f32.mrf.mxu0
  %1471 = vdwg.mxu0
  %1472 = vmatprep.subr.mxu0 0.0
  %1473 = vmatpush1.msra.mxu0 0.0
  %1474 = vmatprep.subr.mxu0 0.0
  %1475 = vmatpush1.msra.mxu0 0.0
  %1476 = vmatprep.subr.mxu0 0.0
  %1477 = vmatpush1.msra.mxu0 0.0
  %1478 = vmatprep.subr.mxu0 0.0
  %1479 = vmatpush1.msra.mxu0 0.0
  %1480 = vmatprep.subr.mxu0 0.0
  %1481 = vmatpush1.msra.mxu0 0.0
  %1482 = vmatprep.subr.mxu0 0.0
  %1483 = vmatpush1.msra.mxu0 0.0
  %1484 = vmatprep.subr.mxu0 0.0
  %1485 = vmatpush1.msra.mxu0 0.0
  %1486 = vmatprep.subr.mxu0 0.0
  %1487 = vmatpush1.msra.mxu0 0.0
  %1488 = vmatprep.subr.mxu0 0.0
  %1489 = vmatpush1.msra.mxu0 0.0
  %1490 = vmatprep.subr.mxu0 0.0
  %1491 = vmatpush1.msra.mxu0 0.0
  %1492 = vmatprep.subr.mxu0 0.0
  %1493 = vmatpush1.msra.mxu0 0.0
  %1494 = vmatprep.subr.mxu0 0.0
  %1495 = vmatpush1.msra.mxu0 0.0
  %1496 = vmatprep.subr.mxu0 0.0
  %1497 = vmatpush1.msra.mxu0 %v602
  %1498 = vmatprep.subr.mxu0 0.0
  %1499 = vmatpush1.msra.mxu0 %v601
  %1500 = vmatprep.subr.mxu0 0.0
  %1501 = vmatpush1.msra.mxu0 %v600
  %1502 = vmatprep.subr.mxu0 0.0
  %1503 = vmatpush1.msra.mxu0 %v599
  %1504 = vmatprep.subr.mxu0 0.0
  %1505 = vmatpush2.msra.mxu0 0.0
  %1506 = vmatprep.subr.mxu0 0.0
  %1507 = vmatpush2.msra.mxu0 0.0
  %1508 = vmatprep.subr.mxu0 0.0
  %1509 = vmatpush2.msra.mxu0 0.0
  %1510 = vmatprep.subr.mxu0 0.0
  %1511 = vmatpush2.msra.mxu0 0.0
  %1512 = vmatprep.subr.mxu0 0.0
  %1513 = vmatpush2.msra.mxu0 0.0
  %1514 = vmatprep.subr.mxu0 0.0
  %1515 = vmatpush2.msra.mxu0 0.0
  %1516 = vmatprep.subr.mxu0 0.0
  %1517 = vmatpush2.msra.mxu0 0.0
  %1518 = vmatprep.subr.mxu0 0.0
  %1519 = vmatpush2.msra.mxu0 0.0
  %1520 = vmatprep.subr.mxu0 0.0
  %1521 = vmatpush2.msra.mxu0 0.0
  %1522 = vmatprep.subr.mxu0 0.0
  %1523 = vmatpush2.msra.mxu0 0.0
  %1524 = vmatprep.subr.mxu0 0.0
  %1525 = vmatpush2.msra.mxu0 0.0
  %1526 = vmatprep.subr.mxu0 0.0
  %1527 = vmatpush2.msra.mxu0 0.0
  %1528 = vmatprep.subr.mxu0 0.0
  %1529 = vmatpush2.msra.mxu0 0.0
  %1530 = vmatprep.subr.mxu0 0.0
  %1531 = vmatpush2.msra.mxu0 0.0
  %1532 = vmatprep.subr.mxu0 0.0
  %1533 = vmatpush2.msra.mxu0 0.0
  %1534 = vmatprep.subr.mxu0 0.0
  %1535 = vmatpush2.msra.mxu0 0.0
  %1536 = vmatprep.mubr.f32.mxu0 0.0
  %1537 = vmatmul.mubr.f32.gmra.mxu0 %v1330
  %v1538 = vpop.f32.mrf.mxu0
  %v1539 = vadd.f32 %v768, %v1538
  %v1540 = vpop.f32.mrf.mxu0
  %1541 = vdwg.mxu0
  %v1542 = vadd.f32 %v334, %v1399
  %v1543 = vxor.u32 %v1542, 2147483648
  %v1544 = vmul.f32 %v1543, 1.442695
  %v1545 = vpow.pop %v1544
  %v1546 = vadd.f32 %v1545, 1.0
  %v1547 = vrcp.pop %v1546
  %v1548 = vmul.f32 1.0, %v1547
  %v1549 = vadd.f32 %v450, %v1469
  %v1550 = vxor.u32 %v1549, 2147483648
  %v1551 = vmul.f32 %v1550, 1.442695
  %v1552 = vpow.pop %v1551
  %v1553 = vadd.f32 %v1552, 1.0
  %v1554 = vrcp.pop %v1553
  %v1555 = vmul.f32 1.0, %v1554
  %v1556 = vmul.f32 %v1548, %v1539
  %v1557 = vadd.f32 %v566, %v1556
  %v1558 = vtanh.pop %v1557
  %v1559 = vsub.f32 1.0, %v1555
  %v1560 = vmul.f32 %v1559, %v1558
  %v1561 = vmul.f32 %v1555, %v1328
  %v1562 = vadd.f32 %v1560, %v1561
  %v1564 = vsel %vm614, %v1562, 0
  %1566 = vmatprep.subr.mxu0 0.0
  %1567 = vmatpush1.msra.mxu0 0.0
  %1568 = vmatprep.subr.mxu0 0.0
  %1569 = vmatpush1.msra.mxu0 0.0
  %1570 = vmatprep.subr.mxu0 0.0
  %1571 = vmatpush1.msra.mxu0 0.0
  %1572 = vmatprep.subr.mxu0 0.0
  %1573 = vmatpush1.msra.mxu0 0.0
  %1574 = vmatprep.subr.mxu0 0.0
  %1575 = vmatpush1.msra.mxu0 0.0
  %1576 = vmatprep.subr.mxu0 0.0
  %1577 = vmatpush1.msra.mxu0 0.0
  %1578 = vmatprep.subr.mxu0 0.0
  %1579 = vmatpush1.msra.mxu0 0.0
  %1580 = vmatprep.subr.mxu0 0.0
  %1581 = vmatpush1.msra.mxu0 0.0
  %1582 = vmatprep.subr.mxu0 0.0
  %1583 = vmatpush1.msra.mxu0 0.0
  %1584 = vmatprep.subr.mxu0 0.0
  %1585 = vmatpush1.msra.mxu0 0.0
  %1586 = vmatprep.subr.mxu0 0.0
  %1587 = vmatpush1.msra.mxu0 0.0
  %1588 = vmatprep.subr.mxu0 0.0
  %1589 = vmatpush1.msra.mxu0 0.0
  %1590 = vmatprep.subr.mxu0 0.0
  %1591 = vmatpush1.msra.mxu0 %v592
  %1592 = vmatprep.subr.mxu0 0.0
  %1593 = vmatpush1.msra.mxu0 %v591
  %1594 = vmatprep.subr.mxu0 0.0
  %1595 = vmatpush1.msra.mxu0 %v590
  %1596 = vmatprep.subr.mxu0 0.0
  %1597 = vmatpush1.msra.mxu0 %v589
  %1598 = vmatprep.subr.mxu0 0.0
  %1599 = vmatpush2.msra.mxu0 0.0
  %1600 = vmatprep.subr.mxu0 0.0
  %1601 = vmatpush2.msra.mxu0 0.0
  %1602 = vmatprep.subr.mxu0 0.0
  %1603 = vmatpush2.msra.mxu0 0.0
  %1604 = vmatprep.subr.mxu0 0.0
  %1605 = vmatpush2.msra.mxu0 0.0
  %1606 = vmatprep.subr.mxu0 0.0
  %1607 = vmatpush2.msra.mxu0 0.0
  %1608 = vmatprep.subr.mxu0 0.0
  %1609 = vmatpush2.msra.mxu0 0.0
  %1610 = vmatprep.subr.mxu0 0.0
  %1611 = vmatpush2.msra.mxu0 0.0
  %1612 = vmatprep.subr.mxu0 0.0
  %1613 = vmatpush2.msra.mxu0 0.0
  %1614 = vmatprep.subr.mxu0 0.0
  %1615 = vmatpush2.msra.mxu0 0.0
  %1616 = vmatprep.subr.mxu0 0.0
  %1617 = vmatpush2.msra.mxu0 0.0
  %1618 = vmatprep.subr.mxu0 0.0
  %1619 = vmatpush2.msra.mxu0 0.0
  %1620 = vmatprep.subr.mxu0 0.0
  %1621 = vmatpush2.msra.mxu0 0.0
  %1622 = vmatprep.subr.mxu0 0.0
  %1623 = vmatpush2.msra.mxu0 0.0
  %1624 = vmatprep.subr.mxu0 0.0
  %1625 = vmatpush2.msra.mxu0 0.0
  %1626 = vmatprep.subr.mxu0 0.0
  %1627 = vmatpush2.msra.mxu0 0.0
  %1628 = vmatprep.subr.mxu0 0.0
  %1629 = vmatpush2.msra.mxu0 0.0
  %1630 = vmatprep.mubr.f32.mxu0 0.0
  %1631 = vmatmul.mubr.f32.gmra.mxu0 %v1564
  %v1632 = vpop.f32.mrf.mxu0
  %v1633 = vadd.f32 %v612, %v1632
  %v1634 = vpop.f32.mrf.mxu0
  %1635 = vdwg.mxu0
  %1636 = vmatprep.subr.mxu0 0.0
  %1637 = vmatpush1.msra.mxu0 0.0
  %1638 = vmatprep.subr.mxu0 0.0
  %1639 = vmatpush1.msra.mxu0 0.0
  %1640 = vmatprep.subr.mxu0 0.0
  %1641 = vmatpush1.msra.mxu0 0.0
  %1642 = vmatprep.subr.mxu0 0.0
  %1643 = vmatpush1.msra.mxu0 0.0
  %1644 = vmatprep.subr.mxu0 0.0
  %1645 = vmatpush1.msra.mxu0 0.0
  %1646 = vmatprep.subr.mxu0 0.0
  %1647 = vmatpush1.msra.mxu0 0.0
  %1648 = vmatprep.subr.mxu0 0.0
  %1649 = vmatpush1.msra.mxu0 0.0
  %1650 = vmatprep.subr.mxu0 0.0
  %1651 = vmatpush1.msra.mxu0 0.0
  %1652 = vmatprep.subr.mxu0 0.0
  %1653 = vmatpush1.msra.mxu0 0.0
  %1654 = vmatprep.subr.mxu0 0.0
  %1655 = vmatpush1.msra.mxu0 0.0
  %1656 = vmatprep.subr.mxu0 0.0
  %1657 = vmatpush1.msra.mxu0 0.0
  %1658 = vmatprep.subr.mxu0 0.0
  %1659 = vmatpush1.msra.mxu0 0.0
  %1660 = vmatprep.subr.mxu0 0.0
  %1661 = vmatpush1.msra.mxu0 %v597
  %1662 = vmatprep.subr.mxu0 0.0
  %1663 = vmatpush1.msra.mxu0 %v596
  %1664 = vmatprep.subr.mxu0 0.0
  %1665 = vmatpush1.msra.mxu0 %v595
  %1666 = vmatprep.subr.mxu0 0.0
  %1667 = vmatpush1.msra.mxu0 %v594
  %1668 = vmatprep.subr.mxu0 0.0
  %1669 = vmatpush2.msra.mxu0 0.0
  %1670 = vmatprep.subr.mxu0 0.0
  %1671 = vmatpush2.msra.mxu0 0.0
  %1672 = vmatprep.subr.mxu0 0.0
  %1673 = vmatpush2.msra.mxu0 0.0
  %1674 = vmatprep.subr.mxu0 0.0
  %1675 = vmatpush2.msra.mxu0 0.0
  %1676 = vmatprep.subr.mxu0 0.0
  %1677 = vmatpush2.msra.mxu0 0.0
  %1678 = vmatprep.subr.mxu0 0.0
  %1679 = vmatpush2.msra.mxu0 0.0
  %1680 = vmatprep.subr.mxu0 0.0
  %1681 = vmatpush2.msra.mxu0 0.0
  %1682 = vmatprep.subr.mxu0 0.0
  %1683 = vmatpush2.msra.mxu0 0.0
  %1684 = vmatprep.subr.mxu0 0.0
  %1685 = vmatpush2.msra.mxu0 0.0
  %1686 = vmatprep.subr.mxu0 0.0
  %1687 = vmatpush2.msra.mxu0 0.0
  %1688 = vmatprep.subr.mxu0 0.0
  %1689 = vmatpush2.msra.mxu0 0.0
  %1690 = vmatprep.subr.mxu0 0.0
  %1691 = vmatpush2.msra.mxu0 0.0
  %1692 = vmatprep.subr.mxu0 0.0
  %1693 = vmatpush2.msra.mxu0 0.0
  %1694 = vmatprep.subr.mxu0 0.0
  %1695 = vmatpush2.msra.mxu0 0.0
  %1696 = vmatprep.subr.mxu0 0.0
  %1697 = vmatpush2.msra.mxu0 0.0
  %1698 = vmatprep.subr.mxu0 0.0
  %1699 = vmatpush2.msra.mxu0 0.0
  %1700 = vmatprep.mubr.f32.mxu0 0.0
  %1701 = vmatmul.mubr.f32.gmra.mxu0 %v1564
  %v1702 = vpop.f32.mrf.mxu0
  %v1703 = vadd.f32 %v692, %v1702
  %v1704 = vpop.f32.mrf.mxu0
  %1705 = vdwg.mxu0
  %1706 = vmatprep.subr.mxu0 0.0
  %1707 = vmatpush1.msra.mxu0 0.0
  %1708 = vmatprep.subr.mxu0 0.0
  %1709 = vmatpush1.msra.mxu0 0.0
  %1710 = vmatprep.subr.mxu0 0.0
  %1711 = vmatpush1.msra.mxu0 0.0
  %1712 = vmatprep.subr.mxu0 0.0
  %1713 = vmatpush1.msra.mxu0 0.0
  %1714 = vmatprep.subr.mxu0 0.0
  %1715 = vmatpush1.msra.mxu0 0.0
  %1716 = vmatprep.subr.mxu0 0.0
  %1717 = vmatpush1.msra.mxu0 0.0
  %1718 = vmatprep.subr.mxu0 0.0
  %1719 = vmatpush1.msra.mxu0 0.0
  %1720 = vmatprep.subr.mxu0 0.0
  %1721 = vmatpush1.msra.mxu0 0.0
  %1722 = vmatprep.subr.mxu0 0.0
  %1723 = vmatpush1.msra.mxu0 0.0
  %1724 = vmatprep.subr.mxu0 0.0
  %1725 = vmatpush1.msra.mxu0 0.0
  %1726 = vmatprep.subr.mxu0 0.0
  %1727 = vmatpush1.msra.mxu0 0.0
  %1728 = vmatprep.subr.mxu0 0.0
  %1729 = vmatpush1.msra.mxu0 0.0
  %1730 = vmatprep.subr.mxu0 0.0
  %1731 = vmatpush1.msra.mxu0 %v602
  %1732 = vmatprep.subr.mxu0 0.0
  %1733 = vmatpush1.msra.mxu0 %v601
  %1734 = vmatprep.subr.mxu0 0.0
  %1735 = vmatpush1.msra.mxu0 %v600
  %1736 = vmatprep.subr.mxu0 0.0
  %1737 = vmatpush1.msra.mxu0 %v599
  %1738 = vmatprep.subr.mxu0 0.0
  %1739 = vmatpush2.msra.mxu0 0.0
  %1740 = vmatprep.subr.mxu0 0.0
  %1741 = vmatpush2.msra.mxu0 0.0
  %1742 = vmatprep.subr.mxu0 0.0
  %1743 = vmatpush2.msra.mxu0 0.0
  %1744 = vmatprep.subr.mxu0 0.0
  %1745 = vmatpush2.msra.mxu0 0.0
  %1746 = vmatprep.subr.mxu0 0.0
  %1747 = vmatpush2.msra.mxu0 0.0
  %1748 = vmatprep.subr.mxu0 0.0
  %1749 = vmatpush2.msra.mxu0 0.0
  %1750 = vmatprep.subr.mxu0 0.0
  %1751 = vmatpush2.msra.mxu0 0.0
  %1752 = vmatprep.subr.mxu0 0.0
  %1753 = vmatpush2.msra.mxu0 0.0
  %1754 = vmatprep.subr.mxu0 0.0
  %1755 = vmatpush2.msra.mxu0 0.0
  %1756 = vmatprep.subr.mxu0 0.0
  %1757 = vmatpush2.msra.mxu0 0.0
  %1758 = vmatprep.subr.mxu0 0.0
  %1759 = vmatpush2.msra.mxu0 0.0
  %1760 = vmatprep.subr.mxu0 0.0
  %1761 = vmatpush2.msra.mxu0 0.0
  %1762 = vmatprep.subr.mxu0 0.0
  %1763 = vmatpush2.msra.mxu0 0.0
  %1764 = vmatprep.subr.mxu0 0.0
  %1765 = vmatpush2.msra.mxu0 0.0
  %1766 = vmatprep.subr.mxu0 0.0
  %1767 = vmatpush2.msra.mxu0 0.0
  %1768 = vmatprep.subr.mxu0 0.0
  %1769 = vmatpush2.msra.mxu0 0.0
  %1770 = vmatprep.mubr.f32.mxu0 0.0
  %1771 = vmatmul.mubr.f32.gmra.mxu0 %v1564
  %v1772 = vpop.f32.mrf.mxu0
  %v1773 = vadd.f32 %v768, %v1772
  %v1774 = vpop.f32.mrf.mxu0
  %1775 = vdwg.mxu0
  %v1776 = vadd.f32 %v339, %v1633
  %v1777 = vxor.u32 %v1776, 2147483648
  %v1778 = vmul.f32 %v1777, 1.442695
  %v1779 = vpow.pop %v1778
  %v1780 = vadd.f32 %v1779, 1.0
  %v1781 = vrcp.pop %v1780
  %v1782 = vmul.f32 1.0, %v1781
  %v1783 = vadd.f32 %v455, %v1703
  %v1784 = vxor.u32 %v1783, 2147483648
  %v1785 = vmul.f32 %v1784, 1.442695
  %v1786 = vpow.pop %v1785
  %v1787 = vadd.f32 %v1786, 1.0
  %v1788 = vrcp.pop %v1787
  %v1789 = vmul.f32 1.0, %v1788
  %v1790 = vmul.f32 %v1782, %v1773
  %v1791 = vadd.f32 %v571, %v1790
  %v1792 = vtanh.pop %v1791
  %v1793 = vsub.f32 1.0, %v1789
  %v1794 = vmul.f32 %v1793, %v1792
  %v1795 = vmul.f32 %v1789, %v1562
  %v1796 = vadd.f32 %v1794, %v1795
  %v1798 = vsel %vm614, %v1796, 0
  %1800 = vmatprep.subr.mxu0 0.0
  %1801 = vmatpush1.msra.mxu0 0.0
  %1802 = vmatprep.subr.mxu0 0.0
  %1803 = vmatpush1.msra.mxu0 0.0
  %1804 = vmatprep.subr.mxu0 0.0
  %1805 = vmatpush1.msra.mxu0 0.0
  %1806 = vmatprep.subr.mxu0 0.0
  %1807 = vmatpush1.msra.mxu0 0.0
  %1808 = vmatprep.subr.mxu0 0.0
  %1809 = vmatpush1.msra.mxu0 0.0
  %1810 = vmatprep.subr.mxu0 0.0
  %1811 = vmatpush1.msra.mxu0 0.0
  %1812 = vmatprep.subr.mxu0 0.0
  %1813 = vmatpush1.msra.mxu0 0.0
  %1814 = vmatprep.subr.mxu0 0.0
  %1815 = vmatpush1.msra.mxu0 0.0
  %1816 = vmatprep.subr.mxu0 0.0
  %1817 = vmatpush1.msra.mxu0 0.0
  %1818 = vmatprep.subr.mxu0 0.0
  %1819 = vmatpush1.msra.mxu0 0.0
  %1820 = vmatprep.subr.mxu0 0.0
  %1821 = vmatpush1.msra.mxu0 0.0
  %1822 = vmatprep.subr.mxu0 0.0
  %1823 = vmatpush1.msra.mxu0 0.0
  %1824 = vmatprep.subr.mxu0 0.0
  %1825 = vmatpush1.msra.mxu0 %v592
  %1826 = vmatprep.subr.mxu0 0.0
  %1827 = vmatpush1.msra.mxu0 %v591
  %1828 = vmatprep.subr.mxu0 0.0
  %1829 = vmatpush1.msra.mxu0 %v590
  %1830 = vmatprep.subr.mxu0 0.0
  %1831 = vmatpush1.msra.mxu0 %v589
  %1832 = vmatprep.subr.mxu0 0.0
  %1833 = vmatpush2.msra.mxu0 0.0
  %1834 = vmatprep.subr.mxu0 0.0
  %1835 = vmatpush2.msra.mxu0 0.0
  %1836 = vmatprep.subr.mxu0 0.0
  %1837 = vmatpush2.msra.mxu0 0.0
  %1838 = vmatprep.subr.mxu0 0.0
  %1839 = vmatpush2.msra.mxu0 0.0
  %1840 = vmatprep.subr.mxu0 0.0
  %1841 = vmatpush2.msra.mxu0 0.0
  %1842 = vmatprep.subr.mxu0 0.0
  %1843 = vmatpush2.msra.mxu0 0.0
  %1844 = vmatprep.subr.mxu0 0.0
  %1845 = vmatpush2.msra.mxu0 0.0
  %1846 = vmatprep.subr.mxu0 0.0
  %1847 = vmatpush2.msra.mxu0 0.0
  %1848 = vmatprep.subr.mxu0 0.0
  %1849 = vmatpush2.msra.mxu0 0.0
  %1850 = vmatprep.subr.mxu0 0.0
  %1851 = vmatpush2.msra.mxu0 0.0
  %1852 = vmatprep.subr.mxu0 0.0
  %1853 = vmatpush2.msra.mxu0 0.0
  %1854 = vmatprep.subr.mxu0 0.0
  %1855 = vmatpush2.msra.mxu0 0.0
  %1856 = vmatprep.subr.mxu0 0.0
  %1857 = vmatpush2.msra.mxu0 0.0
  %1858 = vmatprep.subr.mxu0 0.0
  %1859 = vmatpush2.msra.mxu0 0.0
  %1860 = vmatprep.subr.mxu0 0.0
  %1861 = vmatpush2.msra.mxu0 0.0
  %1862 = vmatprep.subr.mxu0 0.0
  %1863 = vmatpush2.msra.mxu0 0.0
  %1864 = vmatprep.mubr.f32.mxu0 0.0
  %1865 = vmatmul.mubr.f32.gmra.mxu0 %v1798
  %v1866 = vpop.f32.mrf.mxu0
  %v1867 = vadd.f32 %v612, %v1866
  %v1868 = vpop.f32.mrf.mxu0
  %1869 = vdwg.mxu0
  %1870 = vmatprep.subr.mxu0 0.0
  %1871 = vmatpush1.msra.mxu0 0.0
  %1872 = vmatprep.subr.mxu0 0.0
  %1873 = vmatpush1.msra.mxu0 0.0
  %1874 = vmatprep.subr.mxu0 0.0
  %1875 = vmatpush1.msra.mxu0 0.0
  %1876 = vmatprep.subr.mxu0 0.0
  %1877 = vmatpush1.msra.mxu0 0.0
  %1878 = vmatprep.subr.mxu0 0.0
  %1879 = vmatpush1.msra.mxu0 0.0
  %1880 = vmatprep.subr.mxu0 0.0
  %1881 = vmatpush1.msra.mxu0 0.0
  %1882 = vmatprep.subr.mxu0 0.0
  %1883 = vmatpush1.msra.mxu0 0.0
  %1884 = vmatprep.subr.mxu0 0.0
  %1885 = vmatpush1.msra.mxu0 0.0
  %1886 = vmatprep.subr.mxu0 0.0
  %1887 = vmatpush1.msra.mxu0 0.0
  %1888 = vmatprep.subr.mxu0 0.0
  %1889 = vmatpush1.msra.mxu0 0.0
  %1890 = vmatprep.subr.mxu0 0.0
  %1891 = vmatpush1.msra.mxu0 0.0
  %1892 = vmatprep.subr.mxu0 0.0
  %1893 = vmatpush1.msra.mxu0 0.0
  %1894 = vmatprep.subr.mxu0 0.0
  %1895 = vmatpush1.msra.mxu0 %v597
  %1896 = vmatprep.subr.mxu0 0.0
  %1897 = vmatpush1.msra.mxu0 %v596
  %1898 = vmatprep.subr.mxu0 0.0
  %1899 = vmatpush1.msra.mxu0 %v595
  %1900 = vmatprep.subr.mxu0 0.0
  %1901 = vmatpush1.msra.mxu0 %v594
  %1902 = vmatprep.subr.mxu0 0.0
  %1903 = vmatpush2.msra.mxu0 0.0
  %1904 = vmatprep.subr.mxu0 0.0
  %1905 = vmatpush2.msra.mxu0 0.0
  %1906 = vmatprep.subr.mxu0 0.0
  %1907 = vmatpush2.msra.mxu0 0.0
  %1908 = vmatprep.subr.mxu0 0.0
  %1909 = vmatpush2.msra.mxu0 0.0
  %1910 = vmatprep.subr.mxu0 0.0
  %1911 = vmatpush2.msra.mxu0 0.0
  %1912 = vmatprep.subr.mxu0 0.0
  %1913 = vmatpush2.msra.mxu0 0.0
  %1914 = vmatprep.subr.mxu0 0.0
  %1915 = vmatpush2.msra.mxu0 0.0
  %1916 = vmatprep.subr.mxu0 0.0
  %1917 = vmatpush2.msra.mxu0 0.0
  %1918 = vmatprep.subr.mxu0 0.0
  %1919 = vmatpush2.msra.mxu0 0.0
  %1920 = vmatprep.subr.mxu0 0.0
  %1921 = vmatpush2.msra.mxu0 0.0
  %1922 = vmatprep.subr.mxu0 0.0
  %1923 = vmatpush2.msra.mxu0 0.0
  %1924 = vmatprep.subr.mxu0 0.0
  %1925 = vmatpush2.msra.mxu0 0.0
  %1926 = vmatprep.subr.mxu0 0.0
  %1927 = vmatpush2.msra.mxu0 0.0
  %1928 = vmatprep.subr.mxu0 0.0
  %1929 = vmatpush2.msra.mxu0 0.0
  %1930 = vmatprep.subr.mxu0 0.0
  %1931 = vmatpush2.msra.mxu0 0.0
  %1932 = vmatprep.subr.mxu0 0.0
  %1933 = vmatpush2.msra.mxu0 0.0
  %1934 = vmatprep.mubr.f32.mxu0 0.0
  %1935 = vmatmul.mubr.f32.gmra.mxu0 %v1798
  %v1936 = vpop.f32.mrf.mxu0
  %v1937 = vadd.f32 %v692, %v1936
  %v1938 = vpop.f32.mrf.mxu0
  %1939 = vdwg.mxu0
  %1940 = vmatprep.subr.mxu0 0.0
  %1941 = vmatpush1.msra.mxu0 0.0
  %1942 = vmatprep.subr.mxu0 0.0
  %1943 = vmatpush1.msra.mxu0 0.0
  %1944 = vmatprep.subr.mxu0 0.0
  %1945 = vmatpush1.msra.mxu0 0.0
  %1946 = vmatprep.subr.mxu0 0.0
  %1947 = vmatpush1.msra.mxu0 0.0
  %1948 = vmatprep.subr.mxu0 0.0
  %1949 = vmatpush1.msra.mxu0 0.0
  %1950 = vmatprep.subr.mxu0 0.0
  %1951 = vmatpush1.msra.mxu0 0.0
  %1952 = vmatprep.subr.mxu0 0.0
  %1953 = vmatpush1.msra.mxu0 0.0
  %1954 = vmatprep.subr.mxu0 0.0
  %1955 = vmatpush1.msra.mxu0 0.0
  %1956 = vmatprep.subr.mxu0 0.0
  %1957 = vmatpush1.msra.mxu0 0.0
  %1958 = vmatprep.subr.mxu0 0.0
  %1959 = vmatpush1.msra.mxu0 0.0
  %1960 = vmatprep.subr.mxu0 0.0
  %1961 = vmatpush1.msra.mxu0 0.0
  %1962 = vmatprep.subr.mxu0 0.0
  %1963 = vmatpush1.msra.mxu0 0.0
  %1964 = vmatprep.subr.mxu0 0.0
  %1965 = vmatpush1.msra.mxu0 %v602
  %1966 = vmatprep.subr.mxu0 0.0
  %1967 = vmatpush1.msra.mxu0 %v601
  %1968 = vmatprep.subr.mxu0 0.0
  %1969 = vmatpush1.msra.mxu0 %v600
  %1970 = vmatprep.subr.mxu0 0.0
  %1971 = vmatpush1.msra.mxu0 %v599
  %1972 = vmatprep.subr.mxu0 0.0
  %1973 = vmatpush2.msra.mxu0 0.0
  %1974 = vmatprep.subr.mxu0 0.0
  %1975 = vmatpush2.msra.mxu0 0.0
  %1976 = vmatprep.subr.mxu0 0.0
  %1977 = vmatpush2.msra.mxu0 0.0
  %1978 = vmatprep.subr.mxu0 0.0
  %1979 = vmatpush2.msra.mxu0 0.0
  %1980 = vmatprep.subr.mxu0 0.0
  %1981 = vmatpush2.msra.mxu0 0.0
  %1982 = vmatprep.subr.mxu0 0.0
  %1983 = vmatpush2.msra.mxu0 0.0
  %1984 = vmatprep.subr.mxu0 0.0
  %1985 = vmatpush2.msra.mxu0 0.0
  %1986 = vmatprep.subr.mxu0 0.0
  %1987 = vmatpush2.msra.mxu0 0.0
  %1988 = vmatprep.subr.mxu0 0.0
  %1989 = vmatpush2.msra.mxu0 0.0
  %1990 = vmatprep.subr.mxu0 0.0
  %1991 = vmatpush2.msra.mxu0 0.0
  %1992 = vmatprep.subr.mxu0 0.0
  %1993 = vmatpush2.msra.mxu0 0.0
  %1994 = vmatprep.subr.mxu0 0.0
  %1995 = vmatpush2.msra.mxu0 0.0
  %1996 = vmatprep.subr.mxu0 0.0
  %1997 = vmatpush2.msra.mxu0 0.0
  %1998 = vmatprep.subr.mxu0 0.0
  %1999 = vmatpush2.msra.mxu0 0.0
  %2000 = vmatprep.subr.mxu0 0.0
  %2001 = vmatpush2.msra.mxu0 0.0
  %2002 = vmatprep.subr.mxu0 0.0
  %2003 = vmatpush2.msra.mxu0 0.0
  %2004 = vmatprep.mubr.f32.mxu0 0.0
  %2005 = vmatmul.mubr.f32.gmra.mxu0 %v1798
  %v2006 = vpop.f32.mrf.mxu0
  %v2007 = vadd.f32 %v768, %v2006
  %v2008 = vpop.f32.mrf.mxu0
  %2009 = vdwg.mxu0
  %v2010 = vadd.f32 %v344, %v1867
  %v2011 = vxor.u32 %v2010, 2147483648
  %v2012 = vmul.f32 %v2011, 1.442695
  %v2013 = vpow.pop %v2012
  %v2014 = vadd.f32 %v2013, 1.0
  %v2015 = vrcp.pop %v2014
  %v2016 = vmul.f32 1.0, %v2015
  %v2017 = vadd.f32 %v460, %v1937
  %v2018 = vxor.u32 %v2017, 2147483648
  %v2019 = vmul.f32 %v2018, 1.442695
  %v2020 = vpow.pop %v2019
  %v2021 = vadd.f32 %v2020, 1.0
  %v2022 = vrcp.pop %v2021
  %v2023 = vmul.f32 1.0, %v2022
  %v2024 = vmul.f32 %v2016, %v2007
  %v2025 = vadd.f32 %v576, %v2024
  %v2026 = vtanh.pop %v2025
  %v2027 = vsub.f32 1.0, %v2023
  %v2028 = vmul.f32 %v2027, %v2026
  %v2029 = vmul.f32 %v2023, %v1796
  %v2030 = vadd.f32 %v2028, %v2029
  %v2032 = vsel %vm614, %v2030, 0
  %2034 = vmatprep.subr.mxu0 0.0
  %2035 = vmatpush1.msra.mxu0 0.0
  %2036 = vmatprep.subr.mxu0 0.0
  %2037 = vmatpush1.msra.mxu0 0.0
  %2038 = vmatprep.subr.mxu0 0.0
  %2039 = vmatpush1.msra.mxu0 0.0
  %2040 = vmatprep.subr.mxu0 0.0
  %2041 = vmatpush1.msra.mxu0 0.0
  %2042 = vmatprep.subr.mxu0 0.0
  %2043 = vmatpush1.msra.mxu0 0.0
  %2044 = vmatprep.subr.mxu0 0.0
  %2045 = vmatpush1.msra.mxu0 0.0
  %2046 = vmatprep.subr.mxu0 0.0
  %2047 = vmatpush1.msra.mxu0 0.0
  %2048 = vmatprep.subr.mxu0 0.0
  %2049 = vmatpush1.msra.mxu0 0.0
  %2050 = vmatprep.subr.mxu0 0.0
  %2051 = vmatpush1.msra.mxu0 0.0
  %2052 = vmatprep.subr.mxu0 0.0
  %2053 = vmatpush1.msra.mxu0 0.0
  %2054 = vmatprep.subr.mxu0 0.0
  %2055 = vmatpush1.msra.mxu0 0.0
  %2056 = vmatprep.subr.mxu0 0.0
  %2057 = vmatpush1.msra.mxu0 0.0
  %2058 = vmatprep.subr.mxu0 0.0
  %2059 = vmatpush1.msra.mxu0 %v592
  %2060 = vmatprep.subr.mxu0 0.0
  %2061 = vmatpush1.msra.mxu0 %v591
  %2062 = vmatprep.subr.mxu0 0.0
  %2063 = vmatpush1.msra.mxu0 %v590
  %2064 = vmatprep.subr.mxu0 0.0
  %2065 = vmatpush1.msra.mxu0 %v589
  %2066 = vmatprep.subr.mxu0 0.0
  %2067 = vmatpush2.msra.mxu0 0.0
  %2068 = vmatprep.subr.mxu0 0.0
  %2069 = vmatpush2.msra.mxu0 0.0
  %2070 = vmatprep.subr.mxu0 0.0
  %2071 = vmatpush2.msra.mxu0 0.0
  %2072 = vmatprep.subr.mxu0 0.0
  %2073 = vmatpush2.msra.mxu0 0.0
  %2074 = vmatprep.subr.mxu0 0.0
  %2075 = vmatpush2.msra.mxu0 0.0
  %2076 = vmatprep.subr.mxu0 0.0
  %2077 = vmatpush2.msra.mxu0 0.0
  %2078 = vmatprep.subr.mxu0 0.0
  %2079 = vmatpush2.msra.mxu0 0.0
  %2080 = vmatprep.subr.mxu0 0.0
  %2081 = vmatpush2.msra.mxu0 0.0
  %2082 = vmatprep.subr.mxu0 0.0
  %2083 = vmatpush2.msra.mxu0 0.0
  %2084 = vmatprep.subr.mxu0 0.0
  %2085 = vmatpush2.msra.mxu0 0.0
  %2086 = vmatprep.subr.mxu0 0.0
  %2087 = vmatpush2.msra.mxu0 0.0
  %2088 = vmatprep.subr.mxu0 0.0
  %2089 = vmatpush2.msra.mxu0 0.0
  %2090 = vmatprep.subr.mxu0 0.0
  %2091 = vmatpush2.msra.mxu0 0.0
  %2092 = vmatprep.subr.mxu0 0.0
  %2093 = vmatpush2.msra.mxu0 0.0
  %2094 = vmatprep.subr.mxu0 0.0
  %2095 = vmatpush2.msra.mxu0 0.0
  %2096 = vmatprep.subr.mxu0 0.0
  %2097 = vmatpush2.msra.mxu0 0.0
  %2098 = vmatprep.mubr.f32.mxu0 0.0
  %2099 = vmatmul.mubr.f32.gmra.mxu0 %v2032
  %v2100 = vpop.f32.mrf.mxu0
  %v2101 = vadd.f32 %v612, %v2100
  %v2102 = vpop.f32.mrf.mxu0
  %2103 = vdwg.mxu0
  %2104 = vmatprep.subr.mxu0 0.0
  %2105 = vmatpush1.msra.mxu0 0.0
  %2106 = vmatprep.subr.mxu0 0.0
  %2107 = vmatpush1.msra.mxu0 0.0
  %2108 = vmatprep.subr.mxu0 0.0
  %2109 = vmatpush1.msra.mxu0 0.0
  %2110 = vmatprep.subr.mxu0 0.0
  %2111 = vmatpush1.msra.mxu0 0.0
  %2112 = vmatprep.subr.mxu0 0.0
  %2113 = vmatpush1.msra.mxu0 0.0
  %2114 = vmatprep.subr.mxu0 0.0
  %2115 = vmatpush1.msra.mxu0 0.0
  %2116 = vmatprep.subr.mxu0 0.0
  %2117 = vmatpush1.msra.mxu0 0.0
  %2118 = vmatprep.subr.mxu0 0.0
  %2119 = vmatpush1.msra.mxu0 0.0
  %2120 = vmatprep.subr.mxu0 0.0
  %2121 = vmatpush1.msra.mxu0 0.0
  %2122 = vmatprep.subr.mxu0 0.0
  %2123 = vmatpush1.msra.mxu0 0.0
  %2124 = vmatprep.subr.mxu0 0.0
  %2125 = vmatpush1.msra.mxu0 0.0
  %2126 = vmatprep.subr.mxu0 0.0
  %2127 = vmatpush1.msra.mxu0 0.0
  %2128 = vmatprep.subr.mxu0 0.0
  %2129 = vmatpush1.msra.mxu0 %v597
  %2130 = vmatprep.subr.mxu0 0.0
  %2131 = vmatpush1.msra.mxu0 %v596
  %2132 = vmatprep.subr.mxu0 0.0
  %2133 = vmatpush1.msra.mxu0 %v595
  %2134 = vmatprep.subr.mxu0 0.0
  %2135 = vmatpush1.msra.mxu0 %v594
  %2136 = vmatprep.subr.mxu0 0.0
  %2137 = vmatpush2.msra.mxu0 0.0
  %2138 = vmatprep.subr.mxu0 0.0
  %2139 = vmatpush2.msra.mxu0 0.0
  %2140 = vmatprep.subr.mxu0 0.0
  %2141 = vmatpush2.msra.mxu0 0.0
  %2142 = vmatprep.subr.mxu0 0.0
  %2143 = vmatpush2.msra.mxu0 0.0
  %2144 = vmatprep.subr.mxu0 0.0
  %2145 = vmatpush2.msra.mxu0 0.0
  %2146 = vmatprep.subr.mxu0 0.0
  %2147 = vmatpush2.msra.mxu0 0.0
  %2148 = vmatprep.subr.mxu0 0.0
  %2149 = vmatpush2.msra.mxu0 0.0
  %2150 = vmatprep.subr.mxu0 0.0
  %2151 = vmatpush2.msra.mxu0 0.0
  %2152 = vmatprep.subr.mxu0 0.0
  %2153 = vmatpush2.msra.mxu0 0.0
  %2154 = vmatprep.subr.mxu0 0.0
  %2155 = vmatpush2.msra.mxu0 0.0
  %2156 = vmatprep.subr.mxu0 0.0
  %2157 = vmatpush2.msra.mxu0 0.0
  %2158 = vmatprep.subr.mxu0 0.0
  %2159 = vmatpush2.msra.mxu0 0.0
  %2160 = vmatprep.subr.mxu0 0.0
  %2161 = vmatpush2.msra.mxu0 0.0
  %2162 = vmatprep.subr.mxu0 0.0
  %2163 = vmatpush2.msra.mxu0 0.0
  %2164 = vmatprep.subr.mxu0 0.0
  %2165 = vmatpush2.msra.mxu0 0.0
  %2166 = vmatprep.subr.mxu0 0.0
  %2167 = vmatpush2.msra.mxu0 0.0
  %2168 = vmatprep.mubr.f32.mxu0 0.0
  %2169 = vmatmul.mubr.f32.gmra.mxu0 %v2032
  %v2170 = vpop.f32.mrf.mxu0
  %v2171 = vadd.f32 %v692, %v2170
  %v2172 = vpop.f32.mrf.mxu0
  %2173 = vdwg.mxu0
  %2174 = vmatprep.subr.mxu0 0.0
  %2175 = vmatpush1.msra.mxu0 0.0
  %2176 = vmatprep.subr.mxu0 0.0
  %2177 = vmatpush1.msra.mxu0 0.0
  %2178 = vmatprep.subr.mxu0 0.0
  %2179 = vmatpush1.msra.mxu0 0.0
  %2180 = vmatprep.subr.mxu0 0.0
  %2181 = vmatpush1.msra.mxu0 0.0
  %2182 = vmatprep.subr.mxu0 0.0
  %2183 = vmatpush1.msra.mxu0 0.0
  %2184 = vmatprep.subr.mxu0 0.0
  %2185 = vmatpush1.msra.mxu0 0.0
  %2186 = vmatprep.subr.mxu0 0.0
  %2187 = vmatpush1.msra.mxu0 0.0
  %2188 = vmatprep.subr.mxu0 0.0
  %2189 = vmatpush1.msra.mxu0 0.0
  %2190 = vmatprep.subr.mxu0 0.0
  %2191 = vmatpush1.msra.mxu0 0.0
  %2192 = vmatprep.subr.mxu0 0.0
  %2193 = vmatpush1.msra.mxu0 0.0
  %2194 = vmatprep.subr.mxu0 0.0
  %2195 = vmatpush1.msra.mxu0 0.0
  %2196 = vmatprep.subr.mxu0 0.0
  %2197 = vmatpush1.msra.mxu0 0.0
  %2198 = vmatprep.subr.mxu0 0.0
  %2199 = vmatpush1.msra.mxu0 %v602
  %2200 = vmatprep.subr.mxu0 0.0
  %2201 = vmatpush1.msra.mxu0 %v601
  %2202 = vmatprep.subr.mxu0 0.0
  %2203 = vmatpush1.msra.mxu0 %v600
  %2204 = vmatprep.subr.mxu0 0.0
  %2205 = vmatpush1.msra.mxu0 %v599
  %2206 = vmatprep.subr.mxu0 0.0
  %2207 = vmatpush2.msra.mxu0 0.0
  %2208 = vmatprep.subr.mxu0 0.0
  %2209 = vmatpush2.msra.mxu0 0.0
  %2210 = vmatprep.subr.mxu0 0.0
  %2211 = vmatpush2.msra.mxu0 0.0
  %2212 = vmatprep.subr.mxu0 0.0
  %2213 = vmatpush2.msra.mxu0 0.0
  %2214 = vmatprep.subr.mxu0 0.0
  %2215 = vmatpush2.msra.mxu0 0.0
  %2216 = vmatprep.subr.mxu0 0.0
  %2217 = vmatpush2.msra.mxu0 0.0
  %2218 = vmatprep.subr.mxu0 0.0
  %2219 = vmatpush2.msra.mxu0 0.0
  %2220 = vmatprep.subr.mxu0 0.0
  %2221 = vmatpush2.msra.mxu0 0.0
  %2222 = vmatprep.subr.mxu0 0.0
  %2223 = vmatpush2.msra.mxu0 0.0
  %2224 = vmatprep.subr.mxu0 0.0
  %2225 = vmatpush2.msra.mxu0 0.0
  %2226 = vmatprep.subr.mxu0 0.0
  %2227 = vmatpush2.msra.mxu0 0.0
  %2228 = vmatprep.subr.mxu0 0.0
  %2229 = vmatpush2.msra.mxu0 0.0
  %2230 = vmatprep.subr.mxu0 0.0
  %2231 = vmatpush2.msra.mxu0 0.0
  %2232 = vmatprep.subr.mxu0 0.0
  %2233 = vmatpush2.msra.mxu0 0.0
  %2234 = vmatprep.subr.mxu0 0.0
  %2235 = vmatpush2.msra.mxu0 0.0
  %2236 = vmatprep.subr.mxu0 0.0
  %2237 = vmatpush2.msra.mxu0 0.0
  %2238 = vmatprep.mubr.f32.mxu0 0.0
  %2239 = vmatmul.mubr.f32.gmra.mxu0 %v2032
  %v2240 = vpop.f32.mrf.mxu0
  %v2241 = vadd.f32 %v768, %v2240
  %v2242 = vpop.f32.mrf.mxu0
  %2243 = vdwg.mxu0
  %v2244 = vadd.f32 %v349, %v2101
  %v2245 = vxor.u32 %v2244, 2147483648
  %v2246 = vmul.f32 %v2245, 1.442695
  %v2247 = vpow.pop %v2246
  %v2248 = vadd.f32 %v2247, 1.0
  %v2249 = vrcp.pop %v2248
  %v2250 = vmul.f32 1.0, %v2249
  %v2251 = vadd.f32 %v465, %v2171
  %v2252 = vxor.u32 %v2251, 2147483648
  %v2253 = vmul.f32 %v2252, 1.442695
  %v2254 = vpow.pop %v2253
  %v2255 = vadd.f32 %v2254, 1.0
  %v2256 = vrcp.pop %v2255
  %v2257 = vmul.f32 1.0, %v2256
  %v2258 = vmul.f32 %v2250, %v2241
  %v2259 = vadd.f32 %v581, %v2258
  %v2260 = vtanh.pop %v2259
  %v2261 = vsub.f32 1.0, %v2257
  %v2262 = vmul.f32 %v2261, %v2260
  %v2263 = vmul.f32 %v2257, %v2030
  %v2264 = vadd.f32 %v2262, %v2263
  %v2266 = vsel %vm614, %v2264, 0
  %2268 = vmatprep.subr.mxu0 0.0
  %2269 = vmatpush1.msra.mxu0 0.0
  %2270 = vmatprep.subr.mxu0 0.0
  %2271 = vmatpush1.msra.mxu0 0.0
  %2272 = vmatprep.subr.mxu0 0.0
  %2273 = vmatpush1.msra.mxu0 0.0
  %2274 = vmatprep.subr.mxu0 0.0
  %2275 = vmatpush1.msra.mxu0 0.0
  %2276 = vmatprep.subr.mxu0 0.0
  %2277 = vmatpush1.msra.mxu0 0.0
  %2278 = vmatprep.subr.mxu0 0.0
  %2279 = vmatpush1.msra.mxu0 0.0
  %2280 = vmatprep.subr.mxu0 0.0
  %2281 = vmatpush1.msra.mxu0 0.0
  %2282 = vmatprep.subr.mxu0 0.0
  %2283 = vmatpush1.msra.mxu0 0.0
  %2284 = vmatprep.subr.mxu0 0.0
  %2285 = vmatpush1.msra.mxu0 0.0
  %2286 = vmatprep.subr.mxu0 0.0
  %2287 = vmatpush1.msra.mxu0 0.0
  %2288 = vmatprep.subr.mxu0 0.0
  %2289 = vmatpush1.msra.mxu0 0.0
  %2290 = vmatprep.subr.mxu0 0.0
  %2291 = vmatpush1.msra.mxu0 0.0
  %2292 = vmatprep.subr.mxu0 0.0
  %2293 = vmatpush1.msra.mxu0 %v592
  %2294 = vmatprep.subr.mxu0 0.0
  %2295 = vmatpush1.msra.mxu0 %v591
  %2296 = vmatprep.subr.mxu0 0.0
  %2297 = vmatpush1.msra.mxu0 %v590
  %2298 = vmatprep.subr.mxu0 0.0
  %2299 = vmatpush1.msra.mxu0 %v589
  %2300 = vmatprep.subr.mxu0 0.0
  %2301 = vmatpush2.msra.mxu0 0.0
  %2302 = vmatprep.subr.mxu0 0.0
  %2303 = vmatpush2.msra.mxu0 0.0
  %2304 = vmatprep.subr.mxu0 0.0
  %2305 = vmatpush2.msra.mxu0 0.0
  %2306 = vmatprep.subr.mxu0 0.0
  %2307 = vmatpush2.msra.mxu0 0.0
  %2308 = vmatprep.subr.mxu0 0.0
  %2309 = vmatpush2.msra.mxu0 0.0
  %2310 = vmatprep.subr.mxu0 0.0
  %2311 = vmatpush2.msra.mxu0 0.0
  %2312 = vmatprep.subr.mxu0 0.0
  %2313 = vmatpush2.msra.mxu0 0.0
  %2314 = vmatprep.subr.mxu0 0.0
  %2315 = vmatpush2.msra.mxu0 0.0
  %2316 = vmatprep.subr.mxu0 0.0
  %2317 = vmatpush2.msra.mxu0 0.0
  %2318 = vmatprep.subr.mxu0 0.0
  %2319 = vmatpush2.msra.mxu0 0.0
  %2320 = vmatprep.subr.mxu0 0.0
  %2321 = vmatpush2.msra.mxu0 0.0
  %2322 = vmatprep.subr.mxu0 0.0
  %2323 = vmatpush2.msra.mxu0 0.0
  %2324 = vmatprep.subr.mxu0 0.0
  %2325 = vmatpush2.msra.mxu0 0.0
  %2326 = vmatprep.subr.mxu0 0.0
  %2327 = vmatpush2.msra.mxu0 0.0
  %2328 = vmatprep.subr.mxu0 0.0
  %2329 = vmatpush2.msra.mxu0 0.0
  %2330 = vmatprep.subr.mxu0 0.0
  %2331 = vmatpush2.msra.mxu0 0.0
  %2332 = vmatprep.mubr.f32.mxu0 0.0
  %2333 = vmatmul.mubr.f32.gmra.mxu0 %v2266
  %v2334 = vpop.f32.mrf.mxu0
  %v2335 = vadd.f32 %v612, %v2334
  %v2336 = vpop.f32.mrf.mxu0
  %2337 = vdwg.mxu0
  %2338 = vmatprep.subr.mxu0 0.0
  %2339 = vmatpush1.msra.mxu0 0.0
  %2340 = vmatprep.subr.mxu0 0.0
  %2341 = vmatpush1.msra.mxu0 0.0
  %2342 = vmatprep.subr.mxu0 0.0
  %2343 = vmatpush1.msra.mxu0 0.0
  %2344 = vmatprep.subr.mxu0 0.0
  %2345 = vmatpush1.msra.mxu0 0.0
  %2346 = vmatprep.subr.mxu0 0.0
  %2347 = vmatpush1.msra.mxu0 0.0
  %2348 = vmatprep.subr.mxu0 0.0
  %2349 = vmatpush1.msra.mxu0 0.0
  %2350 = vmatprep.subr.mxu0 0.0
  %2351 = vmatpush1.msra.mxu0 0.0
  %2352 = vmatprep.subr.mxu0 0.0
  %2353 = vmatpush1.msra.mxu0 0.0
  %2354 = vmatprep.subr.mxu0 0.0
  %2355 = vmatpush1.msra.mxu0 0.0
  %2356 = vmatprep.subr.mxu0 0.0
  %2357 = vmatpush1.msra.mxu0 0.0
  %2358 = vmatprep.subr.mxu0 0.0
  %2359 = vmatpush1.msra.mxu0 0.0
  %2360 = vmatprep.subr.mxu0 0.0
  %2361 = vmatpush1.msra.mxu0 0.0
  %2362 = vmatprep.subr.mxu0 0.0
  %2363 = vmatpush1.msra.mxu0 %v597
  %2364 = vmatprep.subr.mxu0 0.0
  %2365 = vmatpush1.msra.mxu0 %v596
  %2366 = vmatprep.subr.mxu0 0.0
  %2367 = vmatpush1.msra.mxu0 %v595
  %2368 = vmatprep.subr.mxu0 0.0
  %2369 = vmatpush1.msra.mxu0 %v594
  %2370 = vmatprep.subr.mxu0 0.0
  %2371 = vmatpush2.msra.mxu0 0.0
  %2372 = vmatprep.subr.mxu0 0.0
  %2373 = vmatpush2.msra.mxu0 0.0
  %2374 = vmatprep.subr.mxu0 0.0
  %2375 = vmatpush2.msra.mxu0 0.0
  %2376 = vmatprep.subr.mxu0 0.0
  %2377 = vmatpush2.msra.mxu0 0.0
  %2378 = vmatprep.subr.mxu0 0.0
  %2379 = vmatpush2.msra.mxu0 0.0
  %2380 = vmatprep.subr.mxu0 0.0
  %2381 = vmatpush2.msra.mxu0 0.0
  %2382 = vmatprep.subr.mxu0 0.0
  %2383 = vmatpush2.msra.mxu0 0.0
  %2384 = vmatprep.subr.mxu0 0.0
  %2385 = vmatpush2.msra.mxu0 0.0
  %2386 = vmatprep.subr.mxu0 0.0
  %2387 = vmatpush2.msra.mxu0 0.0
  %2388 = vmatprep.subr.mxu0 0.0
  %2389 = vmatpush2.msra.mxu0 0.0
  %2390 = vmatprep.subr.mxu0 0.0
  %2391 = vmatpush2.msra.mxu0 0.0
  %2392 = vmatprep.subr.mxu0 0.0
  %2393 = vmatpush2.msra.mxu0 0.0
  %2394 = vmatprep.subr.mxu0 0.0
  %2395 = vmatpush2.msra.mxu0 0.0
  %2396 = vmatprep.subr.mxu0 0.0
  %2397 = vmatpush2.msra.mxu0 0.0
  %2398 = vmatprep.subr.mxu0 0.0
  %2399 = vmatpush2.msra.mxu0 0.0
  %2400 = vmatprep.subr.mxu0 0.0
  %2401 = vmatpush2.msra.mxu0 0.0
  %2402 = vmatprep.mubr.f32.mxu0 0.0
  %2403 = vmatmul.mubr.f32.gmra.mxu0 %v2266
  %v2404 = vpop.f32.mrf.mxu0
  %v2405 = vadd.f32 %v692, %v2404
  %v2406 = vpop.f32.mrf.mxu0
  %2407 = vdwg.mxu0
  %2408 = vmatprep.subr.mxu0 0.0
  %2409 = vmatpush1.msra.mxu0 0.0
  %2410 = vmatprep.subr.mxu0 0.0
  %2411 = vmatpush1.msra.mxu0 0.0
  %2412 = vmatprep.subr.mxu0 0.0
  %2413 = vmatpush1.msra.mxu0 0.0
  %2414 = vmatprep.subr.mxu0 0.0
  %2415 = vmatpush1.msra.mxu0 0.0
  %2416 = vmatprep.subr.mxu0 0.0
  %2417 = vmatpush1.msra.mxu0 0.0
  %2418 = vmatprep.subr.mxu0 0.0
  %2419 = vmatpush1.msra.mxu0 0.0
  %2420 = vmatprep.subr.mxu0 0.0
  %2421 = vmatpush1.msra.mxu0 0.0
  %2422 = vmatprep.subr.mxu0 0.0
  %2423 = vmatpush1.msra.mxu0 0.0
  %2424 = vmatprep.subr.mxu0 0.0
  %2425 = vmatpush1.msra.mxu0 0.0
  %2426 = vmatprep.subr.mxu0 0.0
  %2427 = vmatpush1.msra.mxu0 0.0
  %2428 = vmatprep.subr.mxu0 0.0
  %2429 = vmatpush1.msra.mxu0 0.0
  %2430 = vmatprep.subr.mxu0 0.0
  %2431 = vmatpush1.msra.mxu0 0.0
  %2432 = vmatprep.subr.mxu0 0.0
  %2433 = vmatpush1.msra.mxu0 %v602
  %2434 = vmatprep.subr.mxu0 0.0
  %2435 = vmatpush1.msra.mxu0 %v601
  %2436 = vmatprep.subr.mxu0 0.0
  %2437 = vmatpush1.msra.mxu0 %v600
  %2438 = vmatprep.subr.mxu0 0.0
  %2439 = vmatpush1.msra.mxu0 %v599
  %2440 = vmatprep.subr.mxu0 0.0
  %2441 = vmatpush2.msra.mxu0 0.0
  %2442 = vmatprep.subr.mxu0 0.0
  %2443 = vmatpush2.msra.mxu0 0.0
  %2444 = vmatprep.subr.mxu0 0.0
  %2445 = vmatpush2.msra.mxu0 0.0
  %2446 = vmatprep.subr.mxu0 0.0
  %2447 = vmatpush2.msra.mxu0 0.0
  %2448 = vmatprep.subr.mxu0 0.0
  %2449 = vmatpush2.msra.mxu0 0.0
  %2450 = vmatprep.subr.mxu0 0.0
  %2451 = vmatpush2.msra.mxu0 0.0
  %2452 = vmatprep.subr.mxu0 0.0
  %2453 = vmatpush2.msra.mxu0 0.0
  %2454 = vmatprep.subr.mxu0 0.0
  %2455 = vmatpush2.msra.mxu0 0.0
  %2456 = vmatprep.subr.mxu0 0.0
  %2457 = vmatpush2.msra.mxu0 0.0
  %2458 = vmatprep.subr.mxu0 0.0
  %2459 = vmatpush2.msra.mxu0 0.0
  %2460 = vmatprep.subr.mxu0 0.0
  %2461 = vmatpush2.msra.mxu0 0.0
  %2462 = vmatprep.subr.mxu0 0.0
  %2463 = vmatpush2.msra.mxu0 0.0
  %2464 = vmatprep.subr.mxu0 0.0
  %2465 = vmatpush2.msra.mxu0 0.0
  %2466 = vmatprep.subr.mxu0 0.0
  %2467 = vmatpush2.msra.mxu0 0.0
  %2468 = vmatprep.subr.mxu0 0.0
  %2469 = vmatpush2.msra.mxu0 0.0
  %2470 = vmatprep.subr.mxu0 0.0
  %2471 = vmatpush2.msra.mxu0 0.0
  %2472 = vmatprep.mubr.f32.mxu0 0.0
  %2473 = vmatmul.mubr.f32.gmra.mxu0 %v2266
  %v2474 = vpop.f32.mrf.mxu0
  %v2475 = vadd.f32 %v768, %v2474
  %v2476 = vpop.f32.mrf.mxu0
  %2477 = vdwg.mxu0
  %v2478 = vadd.f32 %v354, %v2335
  %v2479 = vxor.u32 %v2478, 2147483648
  %v2480 = vmul.f32 %v2479, 1.442695
  %v2481 = vpow.pop %v2480
  %v2482 = vadd.f32 %v2481, 1.0
  %v2483 = vrcp.pop %v2482
  %v2484 = vmul.f32 1.0, %v2483
  %v2485 = vadd.f32 %v470, %v2405
  %v2486 = vxor.u32 %v2485, 2147483648
  %v2487 = vmul.f32 %v2486, 1.442695
  %v2488 = vpow.pop %v2487
  %v2489 = vadd.f32 %v2488, 1.0
  %v2490 = vrcp.pop %v2489
  %v2491 = vmul.f32 1.0, %v2490
  %v2492 = vmul.f32 %v2484, %v2475
  %v2493 = vadd.f32 %v586, %v2492
  %v2494 = vtanh.pop %v2493
  %v2495 = vsub.f32 1.0, %v2491
  %v2496 = vmul.f32 %v2495, %v2494
  %v2497 = vmul.f32 %v2491, %v2264
  %v2498 = vadd.f32 %v2496, %v2497
  %v2499 = vld [vmem:[%s6] sm:$0xff]
  %v2500 = vld [vmem:[%s6 + $0x8] sm:$0xff]
  %v2501 = vld [vmem:[%s6 + $0x10] sm:$0xff]
  %v2502 = vld [vmem:[%s6 + $0x18] sm:$0xff]
  %v2503 = vld [vmem:[%s7] sm:$0x1]
  %v2505 = vlaneseq
  %v2506 = vshrl.u32 %v2505, 7
  %v2507 = vsub.s32 0, %v2506
  %v2508 = vrot.slane %v2503, %v2507
  %v2511 = vsel %vm614, %v2498, 0
  %2513 = vmatprep.subr.mxu0 0.0
  %2514 = vmatpush1.msra.mxu0 0.0
  %2515 = vmatprep.subr.mxu0 0.0
  %2516 = vmatpush1.msra.mxu0 0.0
  %2517 = vmatprep.subr.mxu0 0.0
  %2518 = vmatpush1.msra.mxu0 0.0
  %2519 = vmatprep.subr.mxu0 0.0
  %2520 = vmatpush1.msra.mxu0 0.0
  %2521 = vmatprep.subr.mxu0 0.0
  %2522 = vmatpush1.msra.mxu0 0.0
  %2523 = vmatprep.subr.mxu0 0.0
  %2524 = vmatpush1.msra.mxu0 0.0
  %2525 = vmatprep.subr.mxu0 0.0
  %2526 = vmatpush1.msra.mxu0 0.0
  %2527 = vmatprep.subr.mxu0 0.0
  %2528 = vmatpush1.msra.mxu0 0.0
  %2529 = vmatprep.subr.mxu0 0.0
  %2530 = vmatpush1.msra.mxu0 0.0
  %2531 = vmatprep.subr.mxu0 0.0
  %2532 = vmatpush1.msra.mxu0 0.0
  %2533 = vmatprep.subr.mxu0 0.0
  %2534 = vmatpush1.msra.mxu0 0.0
  %2535 = vmatprep.subr.mxu0 0.0
  %2536 = vmatpush1.msra.mxu0 0.0
  %2537 = vmatprep.subr.mxu0 0.0
  %2538 = vmatpush1.msra.mxu0 %v2502
  %2539 = vmatprep.subr.mxu0 0.0
  %2540 = vmatpush1.msra.mxu0 %v2501
  %2541 = vmatprep.subr.mxu0 0.0
  %2542 = vmatpush1.msra.mxu0 %v2500
  %2543 = vmatprep.subr.mxu0 0.0
  %2544 = vmatpush1.msra.mxu0 %v2499
  %2545 = vmatprep.subr.mxu0 0.0
  %2546 = vmatpush2.msra.mxu0 0.0
  %2547 = vmatprep.subr.mxu0 0.0
  %2548 = vmatpush2.msra.mxu0 0.0
  %2549 = vmatprep.subr.mxu0 0.0
  %2550 = vmatpush2.msra.mxu0 0.0
  %2551 = vmatprep.subr.mxu0 0.0
  %2552 = vmatpush2.msra.mxu0 0.0
  %2553 = vmatprep.subr.mxu0 0.0
  %2554 = vmatpush2.msra.mxu0 0.0
  %2555 = vmatprep.subr.mxu0 0.0
  %2556 = vmatpush2.msra.mxu0 0.0
  %2557 = vmatprep.subr.mxu0 0.0
  %2558 = vmatpush2.msra.mxu0 0.0
  %2559 = vmatprep.subr.mxu0 0.0
  %2560 = vmatpush2.msra.mxu0 0.0
  %2561 = vmatprep.subr.mxu0 0.0
  %2562 = vmatpush2.msra.mxu0 0.0
  %2563 = vmatprep.subr.mxu0 0.0
  %2564 = vmatpush2.msra.mxu0 0.0
  %2565 = vmatprep.subr.mxu0 0.0
  %2566 = vmatpush2.msra.mxu0 0.0
  %2567 = vmatprep.subr.mxu0 0.0
  %2568 = vmatpush2.msra.mxu0 0.0
  %2569 = vmatprep.subr.mxu0 0.0
  %2570 = vmatpush2.msra.mxu0 0.0
  %2571 = vmatprep.subr.mxu0 0.0
  %2572 = vmatpush2.msra.mxu0 0.0
  %2573 = vmatprep.subr.mxu0 0.0
  %2574 = vmatpush2.msra.mxu0 0.0
  %2575 = vmatprep.subr.mxu0 0.0
  %2576 = vmatpush2.msra.mxu0 0.0
  %2577 = vmatprep.mubr.f32.mxu0 0.0
  %2578 = vmatmul.mubr.f32.gmra.mxu0 %v2511
  %v2579 = vpop.f32.mrf.mxu0
  %v2580 = vadd.f32 %v2508, %v2579
  %v2581 = vpop.f32.mrf.mxu0
  %2582 = vdwg.mxu0
  %2583 = vst [vmem:[%s8] sm:$0xff] %v2580
  // Predicated region
  $region34: #{ball_predictor_forward.1} parent=0 // pred_check
    _
  $region35: #{ball_predictor_forward.1} parent=0 // pred_check_branch
    %2585 = sbr.rel (0) target = $region37
  $region36: #{ball_predictor_forward.1} parent=0 // pred_region
    _
  $region37: #{ball_predictor_forward.1} parent=0 // pred_fallthru
    _
  // Predicated region
  $region38: #{ball_predictor_forward.1} parent=0 // pred_check
    _
  $region39: #{ball_predictor_forward.1} parent=0 // pred_check_branch
    %2587 = sbr.rel (0) target = $region41
  $region40: #{ball_predictor_forward.1} parent=0 // pred_region
    _
  $region41: #{ball_predictor_forward.1} parent=0 // pred_fallthru
    _

</llo_original>
